<compile_context>
chip_gen: v7x
topology: tpu7x:2x2x1
jax: 0.10.0
libtpu: 0.0.40
codegen_flags: <defaults>
</compile_context>

<pallas_src>
import functools

import jax
import jax.numpy as jnp
import numpy as np
from jax import lax
from jax.experimental import pallas as pl
from jax.experimental.pallas import tpu as pltpu


# ----------------------------------------------------------------------------
# Host-side helper: 3x3 SAME-padding validity masks, one row per tap.
# ----------------------------------------------------------------------------
def _make_tap_masks(H, W):
    hh, ww = np.meshgrid(np.arange(H), np.arange(W), indexing="ij")
    hh = hh.reshape(-1)
    ww = ww.reshape(-1)
    rows = []
    for di in (-1, 0, 1):
        for dj in (-1, 0, 1):
            rows.append(((hh + di >= 0) & (hh + di < H)
                         & (ww + dj >= 0) & (ww + dj < W)))
    return np.stack(rows).astype(np.float32)          # (9, H*W)


# ----------------------------------------------------------------------------
# Pallas kernel: one image (Cin, H*W) per grid step.
# ----------------------------------------------------------------------------
def _ihint_kernel(x_ref,                    # (Cin, L)          activations, f32
                  mask_ref,                 # (9, L)            tap validity masks
                  w1_ref, b1_ref,           # (Cmid, 9*2*Cin), (Cmid, 1)  BN1 folded
                  w2_ref, b2_ref,           # (Cmid, 9*Cmid),  (Cmid, 1)  BN2 folded
                  w3_ref, b3_ref,           # (Chid, Cmid),    (Chid, 1)
                  w4_ref, b4_ref,           # (Cout, Chid),    (Cout, 1)
                  out_ref,                  # (Cout, L)
                  *, W, matmul_dtype):
    f32 = jnp.float32
    x = x_ref[...]                          # (Cin, L)
    _, L = x.shape
    NEG = f32(-3.0e38)                      # stand-in for MaxPool2d's -inf padding

    taps = [(di, dj) for di in (-1, 0, 1) for dj in (-1, 0, 1)]
    mask = mask_ref[...] > 0.5              # (9, L) bool, stays resident
    tap_mask = [mask[k:k + 1, :] for k in range(9)]   # 9 x (1, L)

    def roll_tap(arr, di, dj):
        # out[c, p] = arr[c, (p + di*W + dj) mod L]; every wrapped position is one
        # the corresponding tap mask kills, so this is exact SAME (padding=1).
        s = di * W + dj
        if s == 0:
            return arr
        return pltpu.roll(arr, shift=(-s) % L, axis=1)

    # ---------------- 3x3 avg / max pooling, stride 1, padding 1 -------------
    # One roll per tap, reused for both pools.  AvgPool2d default
    # count_include_pad=True -> always divide by 9.
    avg_acc = x
    max_acc = x
    for k, (di, dj) in enumerate(taps):
        if (di, dj) == (0, 0):
            continue
        r = roll_tap(x, di, dj)
        m = tap_mask[k]
        avg_acc = avg_acc + jnp.where(m, r, f32(0.0))
        max_acc = jnp.maximum(max_acc, jnp.where(m, r, NEG))
    avg = avg_acc * f32(1.0 / 9.0)

    # Cast to the matmul dtype BEFORE im2col so rolls/wheres/concats touch packed
    # vregs when bf16 is requested (no-op for f32).
    cat = jnp.concatenate([x - avg, x - max_acc], axis=0).astype(matmul_dtype)

    # ---------------- 3x3 conv = single big-K matmul via im2col --------------
    def im2col(arr):                                   # (C, L) -> (9*C, L), tap-major
        zero = jnp.asarray(0.0, arr.dtype)
        cols = []
        for k, (di, dj) in enumerate(taps):
            if (di, dj) == (0, 0):
                cols.append(arr)
            else:
                cols.append(jnp.where(tap_mask[k], roll_tap(arr, di, dj), zero))
        return jnp.concatenate(cols, axis=0)

    def dot(w_ref, act):
        return jnp.dot(w_ref[...], act, preferred_element_type=f32)

    # hint_proj block 1: conv3x3 (BN scale folded into w1) + bias + ReLU
    h1 = jnp.maximum(dot(w1_ref, im2col(cat)) + b1_ref[...], 0.0)       # (Cmid, L) f32
    # hint_proj block 2
    hint = jnp.maximum(dot(w2_ref, im2col(h1.astype(matmul_dtype)))
                       + b2_ref[...], 0.0)                              # (Cmid, L) f32
    # MLP: 1x1 conv -> ReLU -> 1x1 conv
    m = jnp.maximum(dot(w3_ref, hint.astype(matmul_dtype)) + b3_ref[...], 0.0)
    o = dot(w4_ref, m.astype(matmul_dtype)) + b4_ref[...]               # (Cout, L)

    out_ref[...] = o.astype(out_ref.dtype)


# ----------------------------------------------------------------------------
# Wrapper (glue): contiguous reshapes + pallas_call plumbing. No transposes.
# ----------------------------------------------------------------------------
def ihint_pallas(x_nchw, params, *, matmul_dtype=jnp.float32):
    """IHint.forward. x_nchw: (N, Cin, H, W) -> (N, Cout, H, W)."""
    w1, b1, w2, b2, w3, b3, w4, b4 = params
    N, Cin, H, W = x_nchw.shape
    HW = H * W
    assert HW % 128 == 0, "H*W must be a multiple of 128 for lane-dense blocks"
    Cout = w4.shape[0]

    # (N, Cin, H, W) -> (N, Cin, H*W): contiguous reshape, no data movement.
    x = x_nchw.reshape(N, Cin, HW).astype(jnp.float32)
    masks = jnp.asarray(_make_tap_masks(H, W))                 # (9, HW) f32

    # Matmul operand dtype (biases / elementwise math stay f32).
    w1, w2, w3, w4 = (w.astype(matmul_dtype) for w in (w1, w2, w3, w4))

    kernel = functools.partial(_ihint_kernel, W=W, matmul_dtype=matmul_dtype)

    def const_spec(arr):
        nd = arr.ndim
        return pl.BlockSpec(arr.shape, lambda b, _nd=nd: (0,) * _nd)

    out = pl.pallas_call(
        kernel,
        out_shape=jax.ShapeDtypeStruct((N, Cout, HW), jnp.float32),
        grid=(N,),                                             # >=2 steps: pipelining + v7x megacore
        in_specs=[
            pl.BlockSpec((None, Cin, HW), lambda b: (b, 0, 0)),   # one image per step
            const_spec(masks),
            const_spec(w1), const_spec(b1),
            const_spec(w2), const_spec(b2),
            const_spec(w3), const_spec(b3),
            const_spec(w4), const_spec(b4),
        ],
        out_specs=pl.BlockSpec((None, Cout, HW), lambda b: (b, 0, 0)),
        compiler_params=pltpu.CompilerParams(
            dimension_semantics=("parallel",)),
    )(x, masks, w1, b1, w2, b2, w3, b3, w4, b4)

    return out.reshape(N, Cout, H, W)


# ----------------------------------------------------------------------------
# Deterministic parameter construction (synthetic; no checkpoint loading).
# ----------------------------------------------------------------------------
def make_params(key, in_ch, out_ch, mid_ch):
    hid = mid_ch * 2
    ks = jax.random.split(key, 12)
    eps = 1e-5

    def conv_w(k, kh, kw, ci, co):
        return jax.random.normal(k, (kh, kw, ci, co), jnp.float32) / np.sqrt(kh * kw * ci)

    # DoubleCNA3x3(in_ch * 2, mid_ch): conv1 + BN1, conv2 + BN2
    w1 = conv_w(ks[0], 3, 3, 2 * in_ch, mid_ch)                 # HWIO
    g1 = 1.0 + 0.1 * jax.random.normal(ks[1], (mid_ch,), jnp.float32)
    be1 = 0.1 * jax.random.normal(ks[2], (mid_ch,), jnp.float32)
    rm1 = 0.1 * jax.random.normal(ks[3], (mid_ch,), jnp.float32)
    rv1 = 1.0 + 0.1 * jax.random.uniform(ks[4], (mid_ch,), jnp.float32)

    w2 = conv_w(ks[5], 3, 3, mid_ch, mid_ch)
    g2 = 1.0 + 0.1 * jax.random.normal(ks[6], (mid_ch,), jnp.float32)
    be2 = 0.1 * jax.random.normal(ks[7], (mid_ch,), jnp.float32)
    rm2 = 0.1 * jax.random.normal(ks[8], (mid_ch,), jnp.float32)
    rv2 = 1.0 + 0.1 * jax.random.uniform(ks[9], (mid_ch,), jnp.float32)

    # MLP(mid_ch, mid_ch*2, out_ch): 1x1 conv -> ReLU -> 1x1 conv
    w3 = jax.random.normal(ks[10], (mid_ch, hid), jnp.float32) / np.sqrt(mid_ch)
    b3 = 0.1 * jax.random.normal(ks[11], (hid,), jnp.float32)
    w4 = jax.random.normal(jax.random.fold_in(key, 99), (hid, out_ch),
                           jnp.float32) / np.sqrt(hid)
    b4 = 0.1 * jax.random.normal(jax.random.fold_in(key, 100), (out_ch,), jnp.float32)

    # Fold inference-mode BatchNorm into per-channel scale / bias.
    s1 = g1 / jnp.sqrt(rv1 + eps); bb1 = be1 - rm1 * s1
    s2 = g2 / jnp.sqrt(rv2 + eps); bb2 = be2 - rm2 * s2

    # Kernel layout: W^T form, BN scale folded into the conv-weight rows, 3x3 taps
    # flattened tap-major to match the in-kernel im2col row ordering.
    w1_mat = (jnp.transpose(w1, (3, 0, 1, 2)).reshape(mid_ch, 9 * 2 * in_ch)
              * s1[:, None])
    w2_mat = (jnp.transpose(w2, (3, 0, 1, 2)).reshape(mid_ch, 9 * mid_ch)
              * s2[:, None])
    kernel_params = (
        w1_mat, bb1.reshape(mid_ch, 1),
        w2_mat, bb2.reshape(mid_ch, 1),
        w3.T, b3.reshape(hid, 1),
        w4.T, b4.reshape(out_ch, 1),
    )
    ref_params = (w1, s1, bb1, w2, s2, bb2, w3, b3, w4, b4)
    return kernel_params, ref_params


# ----------------------------------------------------------------------------
# Pure-JAX reference (for numerical verification only).
# ----------------------------------------------------------------------------
def ihint_reference(x, ref_params):
    w1, s1, b1, w2, s2, b2, w3, b3, w4, b4 = ref_params
    pad = [(0, 0), (0, 0), (1, 1), (1, 1)]
    avg = lax.reduce_window(x, 0.0, lax.add, (1, 1, 3, 3), (1, 1, 1, 1), pad) / 9.0
    mx = lax.reduce_window(x, -jnp.inf, lax.max, (1, 1, 3, 3), (1, 1, 1, 1), pad)
    cat = jnp.concatenate([x - avg, x - mx], axis=1)

    def conv3(inp, w):
        return lax.conv_general_dilated(
            inp, w, (1, 1), 'SAME',
            dimension_numbers=('NCHW', 'HWIO', 'NCHW'),
            precision=lax.Precision.HIGHEST)

    h1 = jax.nn.relu(conv3(cat, w1) * s1[None, :, None, None] + b1[None, :, None, None])
    h2 = jax.nn.relu(conv3(h1, w2) * s2[None, :, None, None] + b2[None, :, None, None])
    m = jax.nn.relu(jnp.einsum('nchw,cd->ndhw', h2, w3, precision='highest')
                    + b3[None, :, None, None])
    o = jnp.einsum('nchw,cd->ndhw', m, w4, precision='highest') + b4[None, :, None, None]
    return o


if __name__ == "__main__":
    N, in_ch, H, W = 2, 4, 16, 16
    out_ch = 8
    mid_ch = out_ch          # mid_ch defaults to out_ch in the module

    key = jax.random.PRNGKey(0)
    kx, kp = jax.random.split(key)
    x = jax.random.normal(kx, (N, in_ch, H, W), jnp.float32)   # NCHW like PyTorch

    kernel_params, ref_params = make_params(kp, in_ch, out_ch, mid_ch)

    run = jax.jit(functools.partial(ihint_pallas, params=kernel_params))
    y = jax.block_until_ready(run(x))

    y_ref = jax.block_until_ready(ihint_reference(x, ref_params))

    assert y.shape == (N, out_ch, H, W), y.shape
    if not np.allclose(np.asarray(y), np.asarray(y_ref), rtol=5e-3, atol=5e-3):
        raise AssertionError("Pallas IHint output does not match reference")

    print("KERNEL_OK")
</pallas_src>

<mosaic_0001>
module attributes {stable_mosaic.version = 11 : i64} {
  func.func @_ihint_kernel(%arg0: i32, %arg1: memref<1x4x256xf32, #tpu.memory_space<vmem>>, %arg2: memref<9x256xf32, #tpu.memory_space<vmem>>, %arg3: memref<8x72xf32, #tpu.memory_space<vmem>>, %arg4: memref<8x1xf32, #tpu.memory_space<vmem>>, %arg5: memref<8x72xf32, #tpu.memory_space<vmem>>, %arg6: memref<8x1xf32, #tpu.memory_space<vmem>>, %arg7: memref<16x8xf32, #tpu.memory_space<vmem>>, %arg8: memref<16x1xf32, #tpu.memory_space<vmem>>, %arg9: memref<8x16xf32, #tpu.memory_space<vmem>>, %arg10: memref<8x1xf32, #tpu.memory_space<vmem>>, %arg11: memref<1x8x256xf32, #tpu.memory_space<vmem>>) attributes {dimension_semantics = [#tpu.dimension_semantics<parallel>], iteration_bounds = array<i64: 2>, scalar_prefetch = 0 : i64, scratch_operands = 0 : i64, tpu.core_type = #tpu.core_type<tc>, window_params = [{transform_indices = @transform_0, window_bounds = array<i64: 1, 4, 256>}, {pipeline_mode = #tpu.pipeline_mode<synchronous>, transform_indices = @transform_1, window_bounds = array<i64: 9, 256>}, {pipeline_mode = #tpu.pipeline_mode<synchronous>, transform_indices = @transform_2, window_bounds = array<i64: 8, 72>}, {pipeline_mode = #tpu.pipeline_mode<synchronous>, transform_indices = @transform_3, window_bounds = array<i64: 8, 1>}, {pipeline_mode = #tpu.pipeline_mode<synchronous>, transform_indices = @transform_4, window_bounds = array<i64: 8, 72>}, {pipeline_mode = #tpu.pipeline_mode<synchronous>, transform_indices = @transform_5, window_bounds = array<i64: 8, 1>}, {pipeline_mode = #tpu.pipeline_mode<synchronous>, transform_indices = @transform_6, window_bounds = array<i64: 16, 8>}, {pipeline_mode = #tpu.pipeline_mode<synchronous>, transform_indices = @transform_7, window_bounds = array<i64: 16, 1>}, {pipeline_mode = #tpu.pipeline_mode<synchronous>, transform_indices = @transform_8, window_bounds = array<i64: 8, 16>}, {pipeline_mode = #tpu.pipeline_mode<synchronous>, transform_indices = @transform_9, window_bounds = array<i64: 8, 1>}, {transform_indices = @transform_10, window_bounds = array<i64: 1, 8, 256>}]} {
    %c0 = arith.constant 0 : index
    %c0_0 = arith.constant 0 : index
    %c0_1 = arith.constant 0 : index
    %0 = vector.load %arg1[%c0, %c0_0, %c0_1] : memref<1x4x256xf32, #tpu.memory_space<vmem>>, vector<1x4x256xf32>
    %1 = vector.shape_cast %0 : vector<1x4x256xf32> to vector<4x256xf32>
    %c0_2 = arith.constant 0 : index
    %c0_3 = arith.constant 0 : index
    %2 = vector.load %arg2[%c0_2, %c0_3] : memref<9x256xf32, #tpu.memory_space<vmem>>, vector<9x256xf32>
    %cst = arith.constant 5.000000e-01 : f32
    %3 = vector.broadcast %cst : f32 to vector<9x256xf32>
    %4 = arith.cmpf ogt, %2, %3 : vector<9x256xf32>
    %5 = vector.extract_strided_slice %4 {offsets = [0, 0], sizes = [1, 256], strides = [1, 1]} : vector<9x256xi1> to vector<1x256xi1>
    %6 = vector.extract_strided_slice %4 {offsets = [1, 0], sizes = [1, 256], strides = [1, 1]} : vector<9x256xi1> to vector<1x256xi1>
    %7 = vector.extract_strided_slice %4 {offsets = [2, 0], sizes = [1, 256], strides = [1, 1]} : vector<9x256xi1> to vector<1x256xi1>
    %8 = vector.extract_strided_slice %4 {offsets = [3, 0], sizes = [1, 256], strides = [1, 1]} : vector<9x256xi1> to vector<1x256xi1>
    %9 = vector.extract_strided_slice %4 {offsets = [5, 0], sizes = [1, 256], strides = [1, 1]} : vector<9x256xi1> to vector<1x256xi1>
    %10 = vector.extract_strided_slice %4 {offsets = [6, 0], sizes = [1, 256], strides = [1, 1]} : vector<9x256xi1> to vector<1x256xi1>
    %11 = vector.extract_strided_slice %4 {offsets = [7, 0], sizes = [1, 256], strides = [1, 1]} : vector<9x256xi1> to vector<1x256xi1>
    %12 = vector.extract_strided_slice %4 {offsets = [8, 0], sizes = [1, 256], strides = [1, 1]} : vector<9x256xi1> to vector<1x256xi1>
    %c17_i32 = arith.constant 17 : i32
    %13 = tpu.dynamic_rotate %1 by %c17_i32 dim 1 : vector<4x256xf32>, i32 -> vector<4x256xf32>
    %cst_4 = arith.constant 0.000000e+00 : f32
    %14 = vector.shape_cast %5 : vector<1x256xi1> to vector<1x256xi1>
    %15 = vector.broadcast %14 : vector<1x256xi1> to vector<4x256xi1>
    %16 = vector.broadcast %cst_4 : f32 to vector<4x256xf32>
    %17 = arith.select %15, %13, %16 : vector<4x256xi1>, vector<4x256xf32>
    %18 = arith.addf %1, %17 : vector<4x256xf32>
    %cst_5 = arith.constant -3.000000e+38 : f32
    %19 = vector.shape_cast %5 : vector<1x256xi1> to vector<1x256xi1>
    %20 = vector.broadcast %19 : vector<1x256xi1> to vector<4x256xi1>
    %21 = vector.broadcast %cst_5 : f32 to vector<4x256xf32>
    %22 = arith.select %20, %13, %21 : vector<4x256xi1>, vector<4x256xf32>
    %23 = arith.maximumf %1, %22 : vector<4x256xf32>
    %c16_i32 = arith.constant 16 : i32
    %24 = tpu.dynamic_rotate %1 by %c16_i32 dim 1 : vector<4x256xf32>, i32 -> vector<4x256xf32>
    %cst_6 = arith.constant 0.000000e+00 : f32
    %25 = vector.shape_cast %6 : vector<1x256xi1> to vector<1x256xi1>
    %26 = vector.broadcast %25 : vector<1x256xi1> to vector<4x256xi1>
    %27 = vector.broadcast %cst_6 : f32 to vector<4x256xf32>
    %28 = arith.select %26, %24, %27 : vector<4x256xi1>, vector<4x256xf32>
    %29 = arith.addf %18, %28 : vector<4x256xf32>
    %cst_7 = arith.constant -3.000000e+38 : f32
    %30 = vector.shape_cast %6 : vector<1x256xi1> to vector<1x256xi1>
    %31 = vector.broadcast %30 : vector<1x256xi1> to vector<4x256xi1>
    %32 = vector.broadcast %cst_7 : f32 to vector<4x256xf32>
    %33 = arith.select %31, %24, %32 : vector<4x256xi1>, vector<4x256xf32>
    %34 = arith.maximumf %23, %33 : vector<4x256xf32>
    %c15_i32 = arith.constant 15 : i32
    %35 = tpu.dynamic_rotate %1 by %c15_i32 dim 1 : vector<4x256xf32>, i32 -> vector<4x256xf32>
    %cst_8 = arith.constant 0.000000e+00 : f32
    %36 = vector.shape_cast %7 : vector<1x256xi1> to vector<1x256xi1>
    %37 = vector.broadcast %36 : vector<1x256xi1> to vector<4x256xi1>
    %38 = vector.broadcast %cst_8 : f32 to vector<4x256xf32>
    %39 = arith.select %37, %35, %38 : vector<4x256xi1>, vector<4x256xf32>
    %40 = arith.addf %29, %39 : vector<4x256xf32>
    %cst_9 = arith.constant -3.000000e+38 : f32
    %41 = vector.shape_cast %7 : vector<1x256xi1> to vector<1x256xi1>
    %42 = vector.broadcast %41 : vector<1x256xi1> to vector<4x256xi1>
    %43 = vector.broadcast %cst_9 : f32 to vector<4x256xf32>
    %44 = arith.select %42, %35, %43 : vector<4x256xi1>, vector<4x256xf32>
    %45 = arith.maximumf %34, %44 : vector<4x256xf32>
    %c1_i32 = arith.constant 1 : i32
    %46 = tpu.dynamic_rotate %1 by %c1_i32 dim 1 : vector<4x256xf32>, i32 -> vector<4x256xf32>
    %cst_10 = arith.constant 0.000000e+00 : f32
    %47 = vector.shape_cast %8 : vector<1x256xi1> to vector<1x256xi1>
    %48 = vector.broadcast %47 : vector<1x256xi1> to vector<4x256xi1>
    %49 = vector.broadcast %cst_10 : f32 to vector<4x256xf32>
    %50 = arith.select %48, %46, %49 : vector<4x256xi1>, vector<4x256xf32>
    %51 = arith.addf %40, %50 : vector<4x256xf32>
    %cst_11 = arith.constant -3.000000e+38 : f32
    %52 = vector.shape_cast %8 : vector<1x256xi1> to vector<1x256xi1>
    %53 = vector.broadcast %52 : vector<1x256xi1> to vector<4x256xi1>
    %54 = vector.broadcast %cst_11 : f32 to vector<4x256xf32>
    %55 = arith.select %53, %46, %54 : vector<4x256xi1>, vector<4x256xf32>
    %56 = arith.maximumf %45, %55 : vector<4x256xf32>
    %c255_i32 = arith.constant 255 : i32
    %57 = tpu.dynamic_rotate %1 by %c255_i32 dim 1 : vector<4x256xf32>, i32 -> vector<4x256xf32>
    %cst_12 = arith.constant 0.000000e+00 : f32
    %58 = vector.shape_cast %9 : vector<1x256xi1> to vector<1x256xi1>
    %59 = vector.broadcast %58 : vector<1x256xi1> to vector<4x256xi1>
    %60 = vector.broadcast %cst_12 : f32 to vector<4x256xf32>
    %61 = arith.select %59, %57, %60 : vector<4x256xi1>, vector<4x256xf32>
    %62 = arith.addf %51, %61 : vector<4x256xf32>
    %cst_13 = arith.constant -3.000000e+38 : f32
    %63 = vector.shape_cast %9 : vector<1x256xi1> to vector<1x256xi1>
    %64 = vector.broadcast %63 : vector<1x256xi1> to vector<4x256xi1>
    %65 = vector.broadcast %cst_13 : f32 to vector<4x256xf32>
    %66 = arith.select %64, %57, %65 : vector<4x256xi1>, vector<4x256xf32>
    %67 = arith.maximumf %56, %66 : vector<4x256xf32>
    %c241_i32 = arith.constant 241 : i32
    %68 = tpu.dynamic_rotate %1 by %c241_i32 dim 1 : vector<4x256xf32>, i32 -> vector<4x256xf32>
    %cst_14 = arith.constant 0.000000e+00 : f32
    %69 = vector.shape_cast %10 : vector<1x256xi1> to vector<1x256xi1>
    %70 = vector.broadcast %69 : vector<1x256xi1> to vector<4x256xi1>
    %71 = vector.broadcast %cst_14 : f32 to vector<4x256xf32>
    %72 = arith.select %70, %68, %71 : vector<4x256xi1>, vector<4x256xf32>
    %73 = arith.addf %62, %72 : vector<4x256xf32>
    %cst_15 = arith.constant -3.000000e+38 : f32
    %74 = vector.shape_cast %10 : vector<1x256xi1> to vector<1x256xi1>
    %75 = vector.broadcast %74 : vector<1x256xi1> to vector<4x256xi1>
    %76 = vector.broadcast %cst_15 : f32 to vector<4x256xf32>
    %77 = arith.select %75, %68, %76 : vector<4x256xi1>, vector<4x256xf32>
    %78 = arith.maximumf %67, %77 : vector<4x256xf32>
    %c240_i32 = arith.constant 240 : i32
    %79 = tpu.dynamic_rotate %1 by %c240_i32 dim 1 : vector<4x256xf32>, i32 -> vector<4x256xf32>
    %cst_16 = arith.constant 0.000000e+00 : f32
    %80 = vector.shape_cast %11 : vector<1x256xi1> to vector<1x256xi1>
    %81 = vector.broadcast %80 : vector<1x256xi1> to vector<4x256xi1>
    %82 = vector.broadcast %cst_16 : f32 to vector<4x256xf32>
    %83 = arith.select %81, %79, %82 : vector<4x256xi1>, vector<4x256xf32>
    %84 = arith.addf %73, %83 : vector<4x256xf32>
    %cst_17 = arith.constant -3.000000e+38 : f32
    %85 = vector.shape_cast %11 : vector<1x256xi1> to vector<1x256xi1>
    %86 = vector.broadcast %85 : vector<1x256xi1> to vector<4x256xi1>
    %87 = vector.broadcast %cst_17 : f32 to vector<4x256xf32>
    %88 = arith.select %86, %79, %87 : vector<4x256xi1>, vector<4x256xf32>
    %89 = arith.maximumf %78, %88 : vector<4x256xf32>
    %c239_i32 = arith.constant 239 : i32
    %90 = tpu.dynamic_rotate %1 by %c239_i32 dim 1 : vector<4x256xf32>, i32 -> vector<4x256xf32>
    %cst_18 = arith.constant 0.000000e+00 : f32
    %91 = vector.shape_cast %12 : vector<1x256xi1> to vector<1x256xi1>
    %92 = vector.broadcast %91 : vector<1x256xi1> to vector<4x256xi1>
    %93 = vector.broadcast %cst_18 : f32 to vector<4x256xf32>
    %94 = arith.select %92, %90, %93 : vector<4x256xi1>, vector<4x256xf32>
    %95 = arith.addf %84, %94 : vector<4x256xf32>
    %cst_19 = arith.constant -3.000000e+38 : f32
    %96 = vector.shape_cast %12 : vector<1x256xi1> to vector<1x256xi1>
    %97 = vector.broadcast %96 : vector<1x256xi1> to vector<4x256xi1>
    %98 = vector.broadcast %cst_19 : f32 to vector<4x256xf32>
    %99 = arith.select %97, %90, %98 : vector<4x256xi1>, vector<4x256xf32>
    %100 = arith.maximumf %89, %99 : vector<4x256xf32>
    %cst_20 = arith.constant 0.111111112 : f32
    %101 = vector.broadcast %cst_20 : f32 to vector<4x256xf32>
    %102 = arith.mulf %95, %101 : vector<4x256xf32>
    %103 = arith.subf %1, %102 : vector<4x256xf32>
    %104 = arith.subf %1, %100 : vector<4x256xf32>
    %105 = tpu.concatenate %103, %104 in 0 : vector<4x256xf32>, vector<4x256xf32> -> vector<8x256xf32>
    %c17_i32_21 = arith.constant 17 : i32
    %106 = tpu.dynamic_rotate %105 by %c17_i32_21 dim 1 : vector<8x256xf32>, i32 -> vector<8x256xf32>
    %cst_22 = arith.constant 0.000000e+00 : f32
    %107 = vector.shape_cast %5 : vector<1x256xi1> to vector<1x256xi1>
    %108 = vector.broadcast %107 : vector<1x256xi1> to vector<8x256xi1>
    %109 = vector.broadcast %cst_22 : f32 to vector<8x256xf32>
    %110 = arith.select %108, %106, %109 : vector<8x256xi1>, vector<8x256xf32>
    %c16_i32_23 = arith.constant 16 : i32
    %111 = tpu.dynamic_rotate %105 by %c16_i32_23 dim 1 : vector<8x256xf32>, i32 -> vector<8x256xf32>
    %cst_24 = arith.constant 0.000000e+00 : f32
    %112 = vector.shape_cast %6 : vector<1x256xi1> to vector<1x256xi1>
    %113 = vector.broadcast %112 : vector<1x256xi1> to vector<8x256xi1>
    %114 = vector.broadcast %cst_24 : f32 to vector<8x256xf32>
    %115 = arith.select %113, %111, %114 : vector<8x256xi1>, vector<8x256xf32>
    %c15_i32_25 = arith.constant 15 : i32
    %116 = tpu.dynamic_rotate %105 by %c15_i32_25 dim 1 : vector<8x256xf32>, i32 -> vector<8x256xf32>
    %cst_26 = arith.constant 0.000000e+00 : f32
    %117 = vector.shape_cast %7 : vector<1x256xi1> to vector<1x256xi1>
    %118 = vector.broadcast %117 : vector<1x256xi1> to vector<8x256xi1>
    %119 = vector.broadcast %cst_26 : f32 to vector<8x256xf32>
    %120 = arith.select %118, %116, %119 : vector<8x256xi1>, vector<8x256xf32>
    %c1_i32_27 = arith.constant 1 : i32
    %121 = tpu.dynamic_rotate %105 by %c1_i32_27 dim 1 : vector<8x256xf32>, i32 -> vector<8x256xf32>
    %cst_28 = arith.constant 0.000000e+00 : f32
    %122 = vector.shape_cast %8 : vector<1x256xi1> to vector<1x256xi1>
    %123 = vector.broadcast %122 : vector<1x256xi1> to vector<8x256xi1>
    %124 = vector.broadcast %cst_28 : f32 to vector<8x256xf32>
    %125 = arith.select %123, %121, %124 : vector<8x256xi1>, vector<8x256xf32>
    %c255_i32_29 = arith.constant 255 : i32
    %126 = tpu.dynamic_rotate %105 by %c255_i32_29 dim 1 : vector<8x256xf32>, i32 -> vector<8x256xf32>
    %cst_30 = arith.constant 0.000000e+00 : f32
    %127 = vector.shape_cast %9 : vector<1x256xi1> to vector<1x256xi1>
    %128 = vector.broadcast %127 : vector<1x256xi1> to vector<8x256xi1>
    %129 = vector.broadcast %cst_30 : f32 to vector<8x256xf32>
    %130 = arith.select %128, %126, %129 : vector<8x256xi1>, vector<8x256xf32>
    %c241_i32_31 = arith.constant 241 : i32
    %131 = tpu.dynamic_rotate %105 by %c241_i32_31 dim 1 : vector<8x256xf32>, i32 -> vector<8x256xf32>
    %cst_32 = arith.constant 0.000000e+00 : f32
    %132 = vector.shape_cast %10 : vector<1x256xi1> to vector<1x256xi1>
    %133 = vector.broadcast %132 : vector<1x256xi1> to vector<8x256xi1>
    %134 = vector.broadcast %cst_32 : f32 to vector<8x256xf32>
    %135 = arith.select %133, %131, %134 : vector<8x256xi1>, vector<8x256xf32>
    %c240_i32_33 = arith.constant 240 : i32
    %136 = tpu.dynamic_rotate %105 by %c240_i32_33 dim 1 : vector<8x256xf32>, i32 -> vector<8x256xf32>
    %cst_34 = arith.constant 0.000000e+00 : f32
    %137 = vector.shape_cast %11 : vector<1x256xi1> to vector<1x256xi1>
    %138 = vector.broadcast %137 : vector<1x256xi1> to vector<8x256xi1>
    %139 = vector.broadcast %cst_34 : f32 to vector<8x256xf32>
    %140 = arith.select %138, %136, %139 : vector<8x256xi1>, vector<8x256xf32>
    %c239_i32_35 = arith.constant 239 : i32
    %141 = tpu.dynamic_rotate %105 by %c239_i32_35 dim 1 : vector<8x256xf32>, i32 -> vector<8x256xf32>
    %cst_36 = arith.constant 0.000000e+00 : f32
    %142 = vector.shape_cast %12 : vector<1x256xi1> to vector<1x256xi1>
    %143 = vector.broadcast %142 : vector<1x256xi1> to vector<8x256xi1>
    %144 = vector.broadcast %cst_36 : f32 to vector<8x256xf32>
    %145 = arith.select %143, %141, %144 : vector<8x256xi1>, vector<8x256xf32>
    %146 = tpu.concatenate %110, %115, %120, %125, %105, %130, %135, %140, %145 in 0 : vector<8x256xf32>, vector<8x256xf32>, vector<8x256xf32>, vector<8x256xf32>, vector<8x256xf32>, vector<8x256xf32>, vector<8x256xf32>, vector<8x256xf32>, vector<8x256xf32> -> vector<72x256xf32>
    %c0_37 = arith.constant 0 : index
    %c0_38 = arith.constant 0 : index
    %147 = vector.load %arg3[%c0_37, %c0_38] : memref<8x72xf32, #tpu.memory_space<vmem>>, vector<8x72xf32>
    %cst_39 = arith.constant dense<0.000000e+00> : vector<8x256xf32>
    %148 = tpu.matmul %147, %146, %cst_39 {dimension_numbers = #tpu.dot_dimension_numbers<[1], [0], [0], [1], [0, 0, 1, 1], [], []>} : vector<8x72xf32>, vector<72x256xf32>, vector<8x256xf32> -> vector<8x256xf32>
    %c0_40 = arith.constant 0 : index
    %c0_41 = arith.constant 0 : index
    %149 = vector.load %arg4[%c0_40, %c0_41] : memref<8x1xf32, #tpu.memory_space<vmem>>, vector<8x1xf32>
    %150 = vector.broadcast %149 : vector<8x1xf32> to vector<8x256xf32>
    %151 = arith.addf %148, %150 : vector<8x256xf32>
    %cst_42 = arith.constant 0.000000e+00 : f32
    %152 = vector.broadcast %cst_42 : f32 to vector<8x256xf32>
    %153 = arith.maximumf %151, %152 : vector<8x256xf32>
    %c17_i32_43 = arith.constant 17 : i32
    %154 = tpu.dynamic_rotate %153 by %c17_i32_43 dim 1 : vector<8x256xf32>, i32 -> vector<8x256xf32>
    %cst_44 = arith.constant 0.000000e+00 : f32
    %155 = vector.shape_cast %5 : vector<1x256xi1> to vector<1x256xi1>
    %156 = vector.broadcast %155 : vector<1x256xi1> to vector<8x256xi1>
    %157 = vector.broadcast %cst_44 : f32 to vector<8x256xf32>
    %158 = arith.select %156, %154, %157 : vector<8x256xi1>, vector<8x256xf32>
    %c16_i32_45 = arith.constant 16 : i32
    %159 = tpu.dynamic_rotate %153 by %c16_i32_45 dim 1 : vector<8x256xf32>, i32 -> vector<8x256xf32>
    %cst_46 = arith.constant 0.000000e+00 : f32
    %160 = vector.shape_cast %6 : vector<1x256xi1> to vector<1x256xi1>
    %161 = vector.broadcast %160 : vector<1x256xi1> to vector<8x256xi1>
    %162 = vector.broadcast %cst_46 : f32 to vector<8x256xf32>
    %163 = arith.select %161, %159, %162 : vector<8x256xi1>, vector<8x256xf32>
    %c15_i32_47 = arith.constant 15 : i32
    %164 = tpu.dynamic_rotate %153 by %c15_i32_47 dim 1 : vector<8x256xf32>, i32 -> vector<8x256xf32>
    %cst_48 = arith.constant 0.000000e+00 : f32
    %165 = vector.shape_cast %7 : vector<1x256xi1> to vector<1x256xi1>
    %166 = vector.broadcast %165 : vector<1x256xi1> to vector<8x256xi1>
    %167 = vector.broadcast %cst_48 : f32 to vector<8x256xf32>
    %168 = arith.select %166, %164, %167 : vector<8x256xi1>, vector<8x256xf32>
    %c1_i32_49 = arith.constant 1 : i32
    %169 = tpu.dynamic_rotate %153 by %c1_i32_49 dim 1 : vector<8x256xf32>, i32 -> vector<8x256xf32>
    %cst_50 = arith.constant 0.000000e+00 : f32
    %170 = vector.shape_cast %8 : vector<1x256xi1> to vector<1x256xi1>
    %171 = vector.broadcast %170 : vector<1x256xi1> to vector<8x256xi1>
    %172 = vector.broadcast %cst_50 : f32 to vector<8x256xf32>
    %173 = arith.select %171, %169, %172 : vector<8x256xi1>, vector<8x256xf32>
    %c255_i32_51 = arith.constant 255 : i32
    %174 = tpu.dynamic_rotate %153 by %c255_i32_51 dim 1 : vector<8x256xf32>, i32 -> vector<8x256xf32>
    %cst_52 = arith.constant 0.000000e+00 : f32
    %175 = vector.shape_cast %9 : vector<1x256xi1> to vector<1x256xi1>
    %176 = vector.broadcast %175 : vector<1x256xi1> to vector<8x256xi1>
    %177 = vector.broadcast %cst_52 : f32 to vector<8x256xf32>
    %178 = arith.select %176, %174, %177 : vector<8x256xi1>, vector<8x256xf32>
    %c241_i32_53 = arith.constant 241 : i32
    %179 = tpu.dynamic_rotate %153 by %c241_i32_53 dim 1 : vector<8x256xf32>, i32 -> vector<8x256xf32>
    %cst_54 = arith.constant 0.000000e+00 : f32
    %180 = vector.shape_cast %10 : vector<1x256xi1> to vector<1x256xi1>
    %181 = vector.broadcast %180 : vector<1x256xi1> to vector<8x256xi1>
    %182 = vector.broadcast %cst_54 : f32 to vector<8x256xf32>
    %183 = arith.select %181, %179, %182 : vector<8x256xi1>, vector<8x256xf32>
    %c240_i32_55 = arith.constant 240 : i32
    %184 = tpu.dynamic_rotate %153 by %c240_i32_55 dim 1 : vector<8x256xf32>, i32 -> vector<8x256xf32>
    %cst_56 = arith.constant 0.000000e+00 : f32
    %185 = vector.shape_cast %11 : vector<1x256xi1> to vector<1x256xi1>
    %186 = vector.broadcast %185 : vector<1x256xi1> to vector<8x256xi1>
    %187 = vector.broadcast %cst_56 : f32 to vector<8x256xf32>
    %188 = arith.select %186, %184, %187 : vector<8x256xi1>, vector<8x256xf32>
    %c239_i32_57 = arith.constant 239 : i32
    %189 = tpu.dynamic_rotate %153 by %c239_i32_57 dim 1 : vector<8x256xf32>, i32 -> vector<8x256xf32>
    %cst_58 = arith.constant 0.000000e+00 : f32
    %190 = vector.shape_cast %12 : vector<1x256xi1> to vector<1x256xi1>
    %191 = vector.broadcast %190 : vector<1x256xi1> to vector<8x256xi1>
    %192 = vector.broadcast %cst_58 : f32 to vector<8x256xf32>
    %193 = arith.select %191, %189, %192 : vector<8x256xi1>, vector<8x256xf32>
    %194 = tpu.concatenate %158, %163, %168, %173, %153, %178, %183, %188, %193 in 0 : vector<8x256xf32>, vector<8x256xf32>, vector<8x256xf32>, vector<8x256xf32>, vector<8x256xf32>, vector<8x256xf32>, vector<8x256xf32>, vector<8x256xf32>, vector<8x256xf32> -> vector<72x256xf32>
    %c0_59 = arith.constant 0 : index
    %c0_60 = arith.constant 0 : index
    %195 = vector.load %arg5[%c0_59, %c0_60] : memref<8x72xf32, #tpu.memory_space<vmem>>, vector<8x72xf32>
    %cst_61 = arith.constant dense<0.000000e+00> : vector<8x256xf32>
    %196 = tpu.matmul %195, %194, %cst_61 {dimension_numbers = #tpu.dot_dimension_numbers<[1], [0], [0], [1], [0, 0, 1, 1], [], []>} : vector<8x72xf32>, vector<72x256xf32>, vector<8x256xf32> -> vector<8x256xf32>
    %c0_62 = arith.constant 0 : index
    %c0_63 = arith.constant 0 : index
    %197 = vector.load %arg6[%c0_62, %c0_63] : memref<8x1xf32, #tpu.memory_space<vmem>>, vector<8x1xf32>
    %198 = vector.broadcast %197 : vector<8x1xf32> to vector<8x256xf32>
    %199 = arith.addf %196, %198 : vector<8x256xf32>
    %cst_64 = arith.constant 0.000000e+00 : f32
    %200 = vector.broadcast %cst_64 : f32 to vector<8x256xf32>
    %201 = arith.maximumf %199, %200 : vector<8x256xf32>
    %c0_65 = arith.constant 0 : index
    %c0_66 = arith.constant 0 : index
    %202 = vector.load %arg7[%c0_65, %c0_66] : memref<16x8xf32, #tpu.memory_space<vmem>>, vector<16x8xf32>
    %cst_67 = arith.constant dense<0.000000e+00> : vector<16x256xf32>
    %203 = tpu.matmul %202, %201, %cst_67 {dimension_numbers = #tpu.dot_dimension_numbers<[1], [0], [0], [1], [0, 0, 1, 1], [], []>} : vector<16x8xf32>, vector<8x256xf32>, vector<16x256xf32> -> vector<16x256xf32>
    %c0_68 = arith.constant 0 : index
    %c0_69 = arith.constant 0 : index
    %204 = vector.load %arg8[%c0_68, %c0_69] : memref<16x1xf32, #tpu.memory_space<vmem>>, vector<16x1xf32>
    %205 = vector.broadcast %204 : vector<16x1xf32> to vector<16x256xf32>
    %206 = arith.addf %203, %205 : vector<16x256xf32>
    %cst_70 = arith.constant 0.000000e+00 : f32
    %207 = vector.broadcast %cst_70 : f32 to vector<16x256xf32>
    %208 = arith.maximumf %206, %207 : vector<16x256xf32>
    %c0_71 = arith.constant 0 : index
    %c0_72 = arith.constant 0 : index
    %209 = vector.load %arg9[%c0_71, %c0_72] : memref<8x16xf32, #tpu.memory_space<vmem>>, vector<8x16xf32>
    %cst_73 = arith.constant dense<0.000000e+00> : vector<8x256xf32>
    %210 = tpu.matmul %209, %208, %cst_73 {dimension_numbers = #tpu.dot_dimension_numbers<[1], [0], [0], [1], [0, 0, 1, 1], [], []>} : vector<8x16xf32>, vector<16x256xf32>, vector<8x256xf32> -> vector<8x256xf32>
    %c0_74 = arith.constant 0 : index
    %c0_75 = arith.constant 0 : index
    %211 = vector.load %arg10[%c0_74, %c0_75] : memref<8x1xf32, #tpu.memory_space<vmem>>, vector<8x1xf32>
    %212 = vector.broadcast %211 : vector<8x1xf32> to vector<8x256xf32>
    %213 = arith.addf %210, %212 : vector<8x256xf32>
    %c0_76 = arith.constant 0 : index
    %c0_77 = arith.constant 0 : index
    %c0_78 = arith.constant 0 : index
    %214 = vector.load %arg11[%c0_76, %c0_77, %c0_78] : memref<1x8x256xf32, #tpu.memory_space<vmem>>, vector<1x8x256xf32>
    %215 = vector.shape_cast %214 : vector<1x8x256xf32> to vector<8x256xf32>
    %216 = vector.shape_cast %213 : vector<8x256xf32> to vector<1x8x256xf32>
    tpu.vector_store %arg11[%c0_76, %c0_77, %c0_78], %216 {strides = array<i32>} : memref<1x8x256xf32, #tpu.memory_space<vmem>>, vector<1x8x256xf32>,
    return
  }
  func.func @transform_0(%arg0: i32) -> (i32, i32, i32) {
    %c0_i32 = arith.constant 0 : i32
    %c0_i32_0 = arith.constant 0 : i32
    %c0_i32_1 = arith.constant 0 : i32
    return %arg0, %c0_i32, %c0_i32_0 : i32, i32, i32
  }
  func.func @transform_1(%arg0: i32) -> (i32, i32) {
    %c0_i32 = arith.constant 0 : i32
    %c0_i32_0 = arith.constant 0 : i32
    %c0_i32_1 = arith.constant 0 : i32
    return %c0_i32, %c0_i32_0 : i32, i32
  }
  func.func @transform_2(%arg0: i32) -> (i32, i32) {
    %c0_i32 = arith.constant 0 : i32
    %c0_i32_0 = arith.constant 0 : i32
    %c0_i32_1 = arith.constant 0 : i32
    return %c0_i32, %c0_i32_0 : i32, i32
  }
  func.func @transform_3(%arg0: i32) -> (i32, i32) {
    %c0_i32 = arith.constant 0 : i32
    %c0_i32_0 = arith.constant 0 : i32
    %c0_i32_1 = arith.constant 0 : i32
    return %c0_i32, %c0_i32_0 : i32, i32
  }
  func.func @transform_4(%arg0: i32) -> (i32, i32) {
    %c0_i32 = arith.constant 0 : i32
    %c0_i32_0 = arith.constant 0 : i32
    %c0_i32_1 = arith.constant 0 : i32
    return %c0_i32, %c0_i32_0 : i32, i32
  }
  func.func @transform_5(%arg0: i32) -> (i32, i32) {
    %c0_i32 = arith.constant 0 : i32
    %c0_i32_0 = arith.constant 0 : i32
    %c0_i32_1 = arith.constant 0 : i32
    return %c0_i32, %c0_i32_0 : i32, i32
  }
  func.func @transform_6(%arg0: i32) -> (i32, i32) {
    %c0_i32 = arith.constant 0 : i32
    %c0_i32_0 = arith.constant 0 : i32
    %c0_i32_1 = arith.constant 0 : i32
    return %c0_i32, %c0_i32_0 : i32, i32
  }
  func.func @transform_7(%arg0: i32) -> (i32, i32) {
    %c0_i32 = arith.constant 0 : i32
    %c0_i32_0 = arith.constant 0 : i32
    %c0_i32_1 = arith.constant 0 : i32
    return %c0_i32, %c0_i32_0 : i32, i32
  }
  func.func @transform_8(%arg0: i32) -> (i32, i32) {
    %c0_i32 = arith.constant 0 : i32
    %c0_i32_0 = arith.constant 0 : i32
    %c0_i32_1 = arith.constant 0 : i32
    return %c0_i32, %c0_i32_0 : i32, i32
  }
  func.func @transform_9(%arg0: i32) -> (i32, i32) {
    %c0_i32 = arith.constant 0 : i32
    %c0_i32_0 = arith.constant 0 : i32
    %c0_i32_1 = arith.constant 0 : i32
    return %c0_i32, %c0_i32_0 : i32, i32
  }
  func.func @transform_10(%arg0: i32) -> (i32, i32, i32) {
    %c0_i32 = arith.constant 0 : i32
    %c0_i32_0 = arith.constant 0 : i32
    %c0_i32_1 = arith.constant 0 : i32
    return %arg0, %c0_i32, %c0_i32_0 : i32, i32, i32
  }
}

</mosaic_0001>

<llo_original>
// kernel: ihint_pallas.1
$region0: #{ihint_pallas.1}
  #allocation0 [shape = 'u32[]', space=smem, size = 0x4, offset = 0x4, fixed_abs, tag = 'smem constant byte address 0x4 - core index']
  #allocation1 [shape = 'u32[144,128]{1,0:T(1,128)}', space=vmem, size = 0x12000, scoped, tag = 'internal scratch']
  %s0 = inlined_call_operand.vmem [shape: f32[2,4,256], index: 0, kind: input, shape index: {}]
  %s1 = inlined_call_operand.vmem [shape: f32[9,256], index: 1, kind: input, shape index: {}]
  %s2 = inlined_call_operand.vmem [shape: f32[8,72], index: 2, kind: input, shape index: {}]
  %s3 = inlined_call_operand.vmem [shape: f32[8,1], index: 3, kind: input, shape index: {}]
  %s4 = inlined_call_operand.vmem [shape: f32[8,72], index: 4, kind: input, shape index: {}]
  %s5 = inlined_call_operand.vmem [shape: f32[8,1], index: 5, kind: input, shape index: {}]
  %s6 = inlined_call_operand.vmem [shape: f32[16,8], index: 6, kind: input, shape index: {}]
  %s7 = inlined_call_operand.vmem [shape: f32[16,1], index: 7, kind: input, shape index: {}]
  %s8 = inlined_call_operand.vmem [shape: f32[8,16], index: 8, kind: input, shape index: {}]
  %s9 = inlined_call_operand.vmem [shape: f32[8,1], index: 9, kind: input, shape index: {}]
  %s10 = inlined_call_operand.vmem [shape: f32[2,8,256], index: 10, kind: output, shape index: {}]
  %s11 = sld [smem:[#allocation0]]
  $region73: #{ihint_pallas.1} parent=0
    _
  %s13 = ssub.s32 1, %s11
  %s14 = scalar_select 0, %s13, %s11
  loop: start=0, step=1, limit=4
  $region2: #{ihint_pallas.1} parent=0 // loop_pre_header
    _
  $region3: #{ihint_pallas.1} parent=0 // loop_header
    %s16 = sphi 0, %s20
    %p17 = scmp.ge.s32.totalorder %s16, 4
    %s26 = sphi 0, %s28
    %s29 = sphi 0, %s26
    %s30 = sphi 0, %s29
    %s46 = sphi 0, %s30
    %s50 = sphi 0, %s50
    %s52 = sphi 0, %s50
    %s53 = sphi 0, %s52
    %s67 = sphi 0, %s53
    %s71 = sphi 0, %s71
    %s73 = sphi 0, %s71
    %s74 = sphi 0, %s73
    %s88 = sphi 0, %s74
    %s92 = sphi 0, %s92
    %s94 = sphi 0, %s92
    %s95 = sphi 0, %s94
    %s109 = sphi 0, %s95
    %s113 = sphi 0, %s113
    %s115 = sphi 0, %s113
    %s116 = sphi 0, %s115
    %s130 = sphi 0, %s116
    %s134 = sphi 0, %s134
    %s136 = sphi 0, %s134
    %s137 = sphi 0, %s136
    %s151 = sphi 0, %s137
    %s155 = sphi 0, %s155
    %s157 = sphi 0, %s155
    %s158 = sphi 0, %s157
    %s172 = sphi 0, %s158
    %s176 = sphi 0, %s176
    %s178 = sphi 0, %s176
    %s179 = sphi 0, %s178
    %s193 = sphi 0, %s179
    %s197 = sphi 0, %s197
    %s199 = sphi 0, %s197
    %s200 = sphi 0, %s199
    %s214 = sphi 0, %s200
    %s218 = sphi 0, %s218
    %s220 = sphi 0, %s218
    %s221 = sphi 0, %s220
    %s235 = sphi 0, %s221
    %s241 = sphi 0, %s243
    %s244 = sphi 0, %s241
    %s245 = sphi 0, %s244
    %s261 = sphi 0, %s245
  $region4: #{ihint_pallas.1} parent=0 // loop_header_branch
    %19 = sbr.rel (%p17) target = $region8
  $region5: #{ihint_pallas.1} parent=0 // loop_body
    %s21 = ssub.s32 %s16, 1
    %s22 = ssub.s32 %s16, 2
    %s23 = sadd.s32 %s16, 1
    %s24 = ssub.s32 %s16, %s23
    %p25 = scmp.eq.s32.totalorder %s24, 0
    %s27 = sadd.s32 %s26, 1
    %s28 = scalar_select %p25, %s26, %s27
    %p31 = pneg %p25
    %p32 = scmp.eq.s32.totalorder %s16, 1
    %p33 = por %p31, %p32
    %p34 = scmp.ne.s32.totalorder %s26, %s29
    %p35 = scmp.eq.s32.totalorder %s16, 0
    %p36 = por %p34, %p35
    %p37 = scmp.ne.s32.totalorder %s26, %s29
    %p38 = scmp.eq.s32.totalorder %s21, 1
    %p39 = por %p37, %p38
    %p40 = scmp.ne.s32.totalorder %s29, %s30
    %p41 = scmp.eq.s32.totalorder %s21, 0
    %p42 = por %p40, %p41
    %p43 = scmp.ne.s32.totalorder %s29, %s30
    %p44 = scmp.eq.s32.totalorder %s22, 1
    %p45 = por %p43, %p44
    %p47 = scmp.ne.s32.totalorder %s30, %s46
    %p48 = scmp.eq.s32.totalorder %s22, 0
    %p49 = por %p47, %p48
    %s51 = sadd.s32 %s50, 1
    %p54 = scmp.eq.s32.totalorder %s16, 1
    %p55 = scmp.ne.s32.totalorder %s50, %s52
    %p56 = scmp.eq.s32.totalorder %s16, 0
    %p57 = por %p55, %p56
    %p58 = scmp.ne.s32.totalorder %s50, %s52
    %p59 = scmp.eq.s32.totalorder %s21, 1
    %p60 = por %p58, %p59
    %p61 = scmp.ne.s32.totalorder %s52, %s53
    %p62 = scmp.eq.s32.totalorder %s21, 0
    %p63 = por %p61, %p62
    %p64 = scmp.ne.s32.totalorder %s52, %s53
    %p65 = scmp.eq.s32.totalorder %s22, 1
    %p66 = por %p64, %p65
    %p68 = scmp.ne.s32.totalorder %s53, %s67
    %p69 = scmp.eq.s32.totalorder %s22, 0
    %p70 = por %p68, %p69
    %s72 = sadd.s32 %s71, 1
    %p75 = scmp.eq.s32.totalorder %s16, 1
    %p76 = scmp.ne.s32.totalorder %s71, %s73
    %p77 = scmp.eq.s32.totalorder %s16, 0
    %p78 = por %p76, %p77
    %p79 = scmp.ne.s32.totalorder %s71, %s73
    %p80 = scmp.eq.s32.totalorder %s21, 1
    %p81 = por %p79, %p80
    %p82 = scmp.ne.s32.totalorder %s73, %s74
    %p83 = scmp.eq.s32.totalorder %s21, 0
    %p84 = por %p82, %p83
    %p85 = scmp.ne.s32.totalorder %s73, %s74
    %p86 = scmp.eq.s32.totalorder %s22, 1
    %p87 = por %p85, %p86
    %p89 = scmp.ne.s32.totalorder %s74, %s88
    %p90 = scmp.eq.s32.totalorder %s22, 0
    %p91 = por %p89, %p90
    %s93 = sadd.s32 %s92, 1
    %p96 = scmp.eq.s32.totalorder %s16, 1
    %p97 = scmp.ne.s32.totalorder %s92, %s94
    %p98 = scmp.eq.s32.totalorder %s16, 0
    %p99 = por %p97, %p98
    %p100 = scmp.ne.s32.totalorder %s92, %s94
    %p101 = scmp.eq.s32.totalorder %s21, 1
    %p102 = por %p100, %p101
    %p103 = scmp.ne.s32.totalorder %s94, %s95
    %p104 = scmp.eq.s32.totalorder %s21, 0
    %p105 = por %p103, %p104
    %p106 = scmp.ne.s32.totalorder %s94, %s95
    %p107 = scmp.eq.s32.totalorder %s22, 1
    %p108 = por %p106, %p107
    %p110 = scmp.ne.s32.totalorder %s95, %s109
    %p111 = scmp.eq.s32.totalorder %s22, 0
    %p112 = por %p110, %p111
    %s114 = sadd.s32 %s113, 1
    %p117 = scmp.eq.s32.totalorder %s16, 1
    %p118 = scmp.ne.s32.totalorder %s113, %s115
    %p119 = scmp.eq.s32.totalorder %s16, 0
    %p120 = por %p118, %p119
    %p121 = scmp.ne.s32.totalorder %s113, %s115
    %p122 = scmp.eq.s32.totalorder %s21, 1
    %p123 = por %p121, %p122
    %p124 = scmp.ne.s32.totalorder %s115, %s116
    %p125 = scmp.eq.s32.totalorder %s21, 0
    %p126 = por %p124, %p125
    %p127 = scmp.ne.s32.totalorder %s115, %s116
    %p128 = scmp.eq.s32.totalorder %s22, 1
    %p129 = por %p127, %p128
    %p131 = scmp.ne.s32.totalorder %s116, %s130
    %p132 = scmp.eq.s32.totalorder %s22, 0
    %p133 = por %p131, %p132
    %s135 = sadd.s32 %s134, 1
    %p138 = scmp.eq.s32.totalorder %s16, 1
    %p139 = scmp.ne.s32.totalorder %s134, %s136
    %p140 = scmp.eq.s32.totalorder %s16, 0
    %p141 = por %p139, %p140
    %p142 = scmp.ne.s32.totalorder %s134, %s136
    %p143 = scmp.eq.s32.totalorder %s21, 1
    %p144 = por %p142, %p143
    %p145 = scmp.ne.s32.totalorder %s136, %s137
    %p146 = scmp.eq.s32.totalorder %s21, 0
    %p147 = por %p145, %p146
    %p148 = scmp.ne.s32.totalorder %s136, %s137
    %p149 = scmp.eq.s32.totalorder %s22, 1
    %p150 = por %p148, %p149
    %p152 = scmp.ne.s32.totalorder %s137, %s151
    %p153 = scmp.eq.s32.totalorder %s22, 0
    %p154 = por %p152, %p153
    %s156 = sadd.s32 %s155, 1
    %p159 = scmp.eq.s32.totalorder %s16, 1
    %p160 = scmp.ne.s32.totalorder %s155, %s157
    %p161 = scmp.eq.s32.totalorder %s16, 0
    %p162 = por %p160, %p161
    %p163 = scmp.ne.s32.totalorder %s155, %s157
    %p164 = scmp.eq.s32.totalorder %s21, 1
    %p165 = por %p163, %p164
    %p166 = scmp.ne.s32.totalorder %s157, %s158
    %p167 = scmp.eq.s32.totalorder %s21, 0
    %p168 = por %p166, %p167
    %p169 = scmp.ne.s32.totalorder %s157, %s158
    %p170 = scmp.eq.s32.totalorder %s22, 1
    %p171 = por %p169, %p170
    %p173 = scmp.ne.s32.totalorder %s158, %s172
    %p174 = scmp.eq.s32.totalorder %s22, 0
    %p175 = por %p173, %p174
    %s177 = sadd.s32 %s176, 1
    %p180 = scmp.eq.s32.totalorder %s16, 1
    %p181 = scmp.ne.s32.totalorder %s176, %s178
    %p182 = scmp.eq.s32.totalorder %s16, 0
    %p183 = por %p181, %p182
    %p184 = scmp.ne.s32.totalorder %s176, %s178
    %p185 = scmp.eq.s32.totalorder %s21, 1
    %p186 = por %p184, %p185
    %p187 = scmp.ne.s32.totalorder %s178, %s179
    %p188 = scmp.eq.s32.totalorder %s21, 0
    %p189 = por %p187, %p188
    %p190 = scmp.ne.s32.totalorder %s178, %s179
    %p191 = scmp.eq.s32.totalorder %s22, 1
    %p192 = por %p190, %p191
    %p194 = scmp.ne.s32.totalorder %s179, %s193
    %p195 = scmp.eq.s32.totalorder %s22, 0
    %p196 = por %p194, %p195
    %s198 = sadd.s32 %s197, 1
    %p201 = scmp.eq.s32.totalorder %s16, 1
    %p202 = scmp.ne.s32.totalorder %s197, %s199
    %p203 = scmp.eq.s32.totalorder %s16, 0
    %p204 = por %p202, %p203
    %p205 = scmp.ne.s32.totalorder %s197, %s199
    %p206 = scmp.eq.s32.totalorder %s21, 1
    %p207 = por %p205, %p206
    %p208 = scmp.ne.s32.totalorder %s199, %s200
    %p209 = scmp.eq.s32.totalorder %s21, 0
    %p210 = por %p208, %p209
    %p211 = scmp.ne.s32.totalorder %s199, %s200
    %p212 = scmp.eq.s32.totalorder %s22, 1
    %p213 = por %p211, %p212
    %p215 = scmp.ne.s32.totalorder %s200, %s214
    %p216 = scmp.eq.s32.totalorder %s22, 0
    %p217 = por %p215, %p216
    %s219 = sadd.s32 %s218, 1
    %p222 = scmp.eq.s32.totalorder %s16, 1
    %p223 = scmp.ne.s32.totalorder %s218, %s220
    %p224 = scmp.eq.s32.totalorder %s16, 0
    %p225 = por %p223, %p224
    %p226 = scmp.ne.s32.totalorder %s218, %s220
    %p227 = scmp.eq.s32.totalorder %s21, 1
    %p228 = por %p226, %p227
    %p229 = scmp.ne.s32.totalorder %s220, %s221
    %p230 = scmp.eq.s32.totalorder %s21, 0
    %p231 = por %p229, %p230
    %p232 = scmp.ne.s32.totalorder %s220, %s221
    %p233 = scmp.eq.s32.totalorder %s22, 1
    %p234 = por %p232, %p233
    %p236 = scmp.ne.s32.totalorder %s221, %s235
    %p237 = scmp.eq.s32.totalorder %s22, 0
    %p238 = por %p236, %p237
    %s239 = ssub.s32 %s16, %s23
    %p240 = scmp.eq.s32.totalorder %s239, 0
    %s242 = sadd.s32 %s241, 1
    %s243 = scalar_select %p240, %s241, %s242
    %p246 = pneg %p240
    %p247 = scmp.eq.s32.totalorder %s16, 1
    %p248 = por %p246, %p247
    %p249 = scmp.ne.s32.totalorder %s241, %s244
    %p250 = scmp.eq.s32.totalorder %s16, 0
    %p251 = por %p249, %p250
    %p252 = scmp.ne.s32.totalorder %s241, %s244
    %p253 = scmp.eq.s32.totalorder %s21, 1
    %p254 = por %p252, %p253
    %p255 = scmp.ne.s32.totalorder %s244, %s245
    %p256 = scmp.eq.s32.totalorder %s21, 0
    %p257 = por %p255, %p256
    %p258 = scmp.ne.s32.totalorder %s244, %s245
    %p259 = scmp.eq.s32.totalorder %s22, 1
    %p260 = por %p258, %p259
    %p262 = scmp.ne.s32.totalorder %s245, %s261
    %p263 = scmp.eq.s32.totalorder %s22, 0
    %p264 = por %p262, %p263
    %p265 = scmp.le.s32.totalorder 1, %s16
    %p266 = scmp.lt.s32.totalorder %s16, 3
    %p267 = pnand %p265, %p266
    %p268 = pneg %p267
    // Predicated region
    $region9: #{ihint_pallas.1} parent=5 // pred_check
      _
    $region10: #{ihint_pallas.1} parent=5 // pred_check_branch
      %270 = sbr.rel (%p267) target = $region12
    $region11: #{ihint_pallas.1} parent=5 // pred_region
      %s271 = ssub.s32 %s16, 1
      // Predicated region
      $region13: #{ihint_pallas.1} parent=11 // pred_check
        %p272 = pneg %p63
      $region14: #{ihint_pallas.1} parent=11 // pred_check_branch
        %274 = sbr.rel (%p272) target = $region16
      $region15: #{ihint_pallas.1} parent=11 // pred_region
        _
      $region16: #{ihint_pallas.1} parent=11 // pred_fallthru
        _
      // Predicated region
      $region17: #{ihint_pallas.1} parent=11 // pred_check
        %p275 = pneg %p84
      $region18: #{ihint_pallas.1} parent=11 // pred_check_branch
        %277 = sbr.rel (%p275) target = $region20
      $region19: #{ihint_pallas.1} parent=11 // pred_region
        _
      $region20: #{ihint_pallas.1} parent=11 // pred_fallthru
        _
      // Predicated region
      $region21: #{ihint_pallas.1} parent=11 // pred_check
        %p278 = pneg %p105
      $region22: #{ihint_pallas.1} parent=11 // pred_check_branch
        %280 = sbr.rel (%p278) target = $region24
      $region23: #{ihint_pallas.1} parent=11 // pred_region
        _
      $region24: #{ihint_pallas.1} parent=11 // pred_fallthru
        _
      // Predicated region
      $region25: #{ihint_pallas.1} parent=11 // pred_check
        %p281 = pneg %p126
      $region26: #{ihint_pallas.1} parent=11 // pred_check_branch
        %283 = sbr.rel (%p281) target = $region28
      $region27: #{ihint_pallas.1} parent=11 // pred_region
        _
      $region28: #{ihint_pallas.1} parent=11 // pred_fallthru
        _
      // Predicated region
      $region29: #{ihint_pallas.1} parent=11 // pred_check
        %p284 = pneg %p147
      $region30: #{ihint_pallas.1} parent=11 // pred_check_branch
        %286 = sbr.rel (%p284) target = $region32
      $region31: #{ihint_pallas.1} parent=11 // pred_region
        _
      $region32: #{ihint_pallas.1} parent=11 // pred_fallthru
        _
      // Predicated region
      $region33: #{ihint_pallas.1} parent=11 // pred_check
        %p287 = pneg %p168
      $region34: #{ihint_pallas.1} parent=11 // pred_check_branch
        %289 = sbr.rel (%p287) target = $region36
      $region35: #{ihint_pallas.1} parent=11 // pred_region
        _
      $region36: #{ihint_pallas.1} parent=11 // pred_fallthru
        _
      // Predicated region
      $region37: #{ihint_pallas.1} parent=11 // pred_check
        %p290 = pneg %p189
      $region38: #{ihint_pallas.1} parent=11 // pred_check_branch
        %292 = sbr.rel (%p290) target = $region40
      $region39: #{ihint_pallas.1} parent=11 // pred_region
        _
      $region40: #{ihint_pallas.1} parent=11 // pred_fallthru
        _
      // Predicated region
      $region41: #{ihint_pallas.1} parent=11 // pred_check
        %p293 = pneg %p210
      $region42: #{ihint_pallas.1} parent=11 // pred_check_branch
        %295 = sbr.rel (%p293) target = $region44
      $region43: #{ihint_pallas.1} parent=11 // pred_region
        _
      $region44: #{ihint_pallas.1} parent=11 // pred_fallthru
        _
      // Predicated region
      $region45: #{ihint_pallas.1} parent=11 // pred_check
        %p296 = pneg %p231
      $region46: #{ihint_pallas.1} parent=11 // pred_check_branch
        %298 = sbr.rel (%p296) target = $region48
      $region47: #{ihint_pallas.1} parent=11 // pred_region
        _
      $region48: #{ihint_pallas.1} parent=11 // pred_fallthru
        _
    $region12: #{ihint_pallas.1} parent=5 // pred_fallthru
      _
    %p299 = scmp.lt.s32.totalorder %s16, 2
    // Predicated region
    $region49: #{ihint_pallas.1} parent=5 // pred_check
      %p300 = pneg %p299
    $region50: #{ihint_pallas.1} parent=5 // pred_check_branch
      %302 = sbr.rel (%p300) target = $region52
    $region51: #{ihint_pallas.1} parent=5 // pred_region
      // Predicated region
      $region53: #{ihint_pallas.1} parent=51 // pred_check
        %p303 = pneg %p36
      $region54: #{ihint_pallas.1} parent=51 // pred_check_branch
        %305 = sbr.rel (%p303) target = $region56
      $region55: #{ihint_pallas.1} parent=51 // pred_region
        %p306 = scmp.lt.s32.totalorder %s16, 1
        %s307 = scalar_select %p306, %s16, 1
        %s308 = smul.addr %s307, 2
        %s309 = smul.addr %s308, 4
        %s310 = scalar_lea.vmem %s0, %s309
      $region56: #{ihint_pallas.1} parent=51 // pred_fallthru
        _
    $region52: #{ihint_pallas.1} parent=5 // pred_fallthru
      _
    %p311 = scmp.le.s32.totalorder 1, %s16
    %p312 = scmp.lt.s32.totalorder %s16, 3
    %p313 = pnand %p311, %p312
    %p314 = pneg %p313
    // Predicated region
    $region57: #{ihint_pallas.1} parent=5 // pred_check
      _
    $region58: #{ihint_pallas.1} parent=5 // pred_check_branch
      %316 = sbr.rel (%p313) target = $region60
    $region59: #{ihint_pallas.1} parent=5 // pred_region
      %s317 = ssub.s32 %s16, 1
      %p318 = scmp.lt.s32.totalorder %s21, 1
      %s319 = scalar_select %p318, %s21, 1
      %s320 = smul.addr %s319, 2
      %s321 = smul.addr %s320, 4
      %s322 = scalar_lea.vmem %s0, %s321
      %p323 = pneg %p42
      %p324 = pneg %p39
      %p325 = pneg %p63
      %p326 = pneg %p60
      %p327 = pneg %p84
      %p328 = pneg %p81
      %p329 = pneg %p105
      %p330 = pneg %p102
      %p331 = pneg %p126
      %p332 = pneg %p123
      %p333 = pneg %p147
      %p334 = pneg %p144
      %p335 = pneg %p168
      %p336 = pneg %p165
      %p337 = pneg %p189
      %p338 = pneg %p186
      %p339 = pneg %p210
      %p340 = pneg %p207
      %p341 = pneg %p231
      %p342 = pneg %p228
      %p343 = pneg %p257
      %p344 = pneg %p254
      %p345 = scmp.lt.s32.totalorder %s21, 1
      %s346 = scalar_select %p345, %s21, 1
      %s347 = smul.addr %s346, 2
      %s348 = smul.addr %s347, 8
      %s349 = scalar_lea.vmem %s10, %s348
      %p350 = scmp.lt.s32.totalorder %s21, 1
      %s351 = scalar_select %p350, %s21, 1
      %s352 = smul.addr %s351, 2
      %s353 = smul.addr %s352, 4
      %s354 = scalar_lea.vmem %s0, %s353
      %p355 = scmp.lt.s32.totalorder %s21, 1
      %s356 = scalar_select %p355, %s21, 1
      %s357 = smul.addr %s356, 2
      %s358 = smul.addr %s357, 8
      %s359 = scalar_lea.vmem %s10, %s358
      %v360 = vld [vmem:[%s354] sm:$0xff]
      %v361 = vld [vmem:[%s1] sm:$0xff]
      %v362 = vld [vmem:[%s1 + $0x8] sm:$0xff]
      %v363 = vld [vmem:[%s1 + $0x10] sm:$0x1]
      %v364 = vld [vmem:[%s1 + $0x18] sm:$0x1]
      %vm365 = vcmp.gt.f32.partialorder %v361, 0.5
      %vm366 = vcmp.gt.f32.partialorder %v362, 0.5
      %vm367 = vcmp.gt.f32.partialorder %v363, 0.5
      %vm368 = vcmp.gt.f32.partialorder %v364, 0.5
      %v370 = vcombine.high %v360, %v360
      %372 = vrot.lane.b32.xlu0 %v360, 17
      %v373 = vpop.permute.xlu0 %372
      %374 = vrot.lane.b32.xlu0 %v370, 17
      %v375 = vpop.permute.xlu0 %374
      %v376 = vlaneseq
      %v377 = vand.u32 %v376, 127
      %vm378 = vcmp.lt.s32.totalorder %v377, 17
      %v379 = vsel %vm378, %v373, %v375
      %v380 = vsel %vm378, %v375, %v373
      %v381 = vsel %vm365, 1, 0
      %v382 = vsel %vm366, 1, 0
      %vm383 = vcmp.eq.s32.totalorder %v381, 1
      %vm384 = vcmp.eq.s32.totalorder %v382, 1
      %v387 = vrot.slane %v380, 1
      %v388 = vrot.slane %v379, 1
      %v389 = vrot.slane %v380, 2
      %v390 = vrot.slane %v379, 2
      %v391 = vrot.slane %v380, 3
      %v392 = vrot.slane %v379, 3
      %v401 = vsel %vm383, %v380, 0.0
      %v402 = vsel %vm384, %v379, 0.0
      %v403 = vsel %vm383, %v387, 0.0
      %v404 = vsel %vm384, %v388, 0.0
      %v405 = vsel %vm383, %v389, 0.0
      %v406 = vsel %vm384, %v390, 0.0
      %v407 = vsel %vm383, %v391, 0.0
      %v408 = vsel %vm384, %v392, 0.0
      %v417 = vcombine.low %v401, %v402
      %v418 = vcombine.low %v403, %v404
      %v419 = vcombine.low %v405, %v406
      %v420 = vcombine.low %v407, %v408
      %vm421 = vcmask 1044484
      %v422 = vrot.slane %v418, 7
      %vm423 = vcmask 1041409
      %v424 = vsel %vm423, %v422, %v417
      %vm425 = vcmask 1045509
      %v426 = vsel %vm425, %v422, %v424
      %v427 = vrot.slane %v419, 6
      %vm428 = vcmask 1042434
      %v429 = vsel %vm428, %v427, %v426
      %vm430 = vcmask 1046534
      %v431 = vsel %vm430, %v427, %v429
      %v432 = vrot.slane %v420, 5
      %vm433 = vcmask 1043459
      %v434 = vsel %vm433, %v432, %v431
      %vm435 = vcmask 1047559
      %v436 = vsel %vm435, %v432, %v434
      %v438 = vadd.f32 %v360, %v436
      %v439 = vsel %vm383, %v380, -3e+38
      %v440 = vsel %vm384, %v379, -3e+38
      %v441 = vsel %vm383, %v387, -3e+38
      %v442 = vsel %vm384, %v388, -3e+38
      %v443 = vsel %vm383, %v389, -3e+38
      %v444 = vsel %vm384, %v390, -3e+38
      %v445 = vsel %vm383, %v391, -3e+38
      %v446 = vsel %vm384, %v392, -3e+38
      %v455 = vcombine.low %v439, %v440
      %v456 = vcombine.low %v441, %v442
      %v457 = vcombine.low %v443, %v444
      %v458 = vcombine.low %v445, %v446
      %v459 = vrot.slane %v456, 7
      %v460 = vsel %vm423, %v459, %v455
      %v461 = vsel %vm425, %v459, %v460
      %v462 = vrot.slane %v457, 6
      %v463 = vsel %vm428, %v462, %v461
      %v464 = vsel %vm430, %v462, %v463
      %v465 = vrot.slane %v458, 5
      %v466 = vsel %vm433, %v465, %v464
      %v467 = vsel %vm435, %v465, %v466
      %v469 = vmax.f32 %v360, %v467
      %470 = vrot.lane.b32.xlu0 %v360, 16
      %v471 = vpop.permute.xlu0 %470
      %472 = vrot.lane.b32.xlu0 %v370, 16
      %v473 = vpop.permute.xlu0 %472
      %vm474 = vcmp.lt.s32.totalorder %v377, 16
      %v475 = vsel %vm474, %v471, %v473
      %v476 = vsel %vm474, %v473, %v471
      %v479 = vrot.slane %v476, 7
      %v480 = vrot.slane %v475, 7
      %v481 = vrot.slane %v476, 1
      %v482 = vrot.slane %v475, 1
      %v483 = vrot.slane %v476, 2
      %v484 = vrot.slane %v475, 2
      %v493 = vsel %vm383, %v479, 0.0
      %v494 = vsel %vm384, %v480, 0.0
      %v495 = vsel %vm383, %v476, 0.0
      %v496 = vsel %vm384, %v475, 0.0
      %v497 = vsel %vm383, %v481, 0.0
      %v498 = vsel %vm384, %v482, 0.0
      %v499 = vsel %vm383, %v483, 0.0
      %v500 = vsel %vm384, %v484, 0.0
      %v509 = vcombine.low %v493, %v494
      %v510 = vcombine.low %v495, %v496
      %v511 = vcombine.low %v497, %v498
      %v512 = vcombine.low %v499, %v500
      %v513 = vrot.slane %v509, 1
      %v514 = vsel %vm423, %v510, %v513
      %v515 = vsel %vm425, %v510, %v514
      %v516 = vrot.slane %v511, 7
      %v517 = vsel %vm428, %v516, %v515
      %v518 = vsel %vm430, %v516, %v517
      %v519 = vrot.slane %v512, 6
      %v520 = vsel %vm433, %v519, %v518
      %v521 = vsel %vm435, %v519, %v520
      %v523 = vadd.f32 %v438, %v521
      %v524 = vsel %vm383, %v479, -3e+38
      %v525 = vsel %vm384, %v480, -3e+38
      %v526 = vsel %vm383, %v476, -3e+38
      %v527 = vsel %vm384, %v475, -3e+38
      %v528 = vsel %vm383, %v481, -3e+38
      %v529 = vsel %vm384, %v482, -3e+38
      %v530 = vsel %vm383, %v483, -3e+38
      %v531 = vsel %vm384, %v484, -3e+38
      %v540 = vcombine.low %v524, %v525
      %v541 = vcombine.low %v526, %v527
      %v542 = vcombine.low %v528, %v529
      %v543 = vcombine.low %v530, %v531
      %v544 = vrot.slane %v540, 1
      %v545 = vsel %vm423, %v541, %v544
      %v546 = vsel %vm425, %v541, %v545
      %v547 = vrot.slane %v542, 7
      %v548 = vsel %vm428, %v547, %v546
      %v549 = vsel %vm430, %v547, %v548
      %v550 = vrot.slane %v543, 6
      %v551 = vsel %vm433, %v550, %v549
      %v552 = vsel %vm435, %v550, %v551
      %v554 = vmax.f32 %v469, %v552
      %555 = vrot.lane.b32.xlu0 %v360, 15
      %v556 = vpop.permute.xlu0 %555
      %557 = vrot.lane.b32.xlu0 %v370, 15
      %v558 = vpop.permute.xlu0 %557
      %vm559 = vcmp.lt.s32.totalorder %v377, 15
      %v560 = vsel %vm559, %v556, %v558
      %v561 = vsel %vm559, %v558, %v556
      %v564 = vrot.slane %v561, 6
      %v565 = vrot.slane %v560, 6
      %v566 = vrot.slane %v561, 7
      %v567 = vrot.slane %v560, 7
      %v568 = vrot.slane %v561, 1
      %v569 = vrot.slane %v560, 1
      %v578 = vsel %vm383, %v564, 0.0
      %v579 = vsel %vm384, %v565, 0.0
      %v580 = vsel %vm383, %v566, 0.0
      %v581 = vsel %vm384, %v567, 0.0
      %v582 = vsel %vm383, %v561, 0.0
      %v583 = vsel %vm384, %v560, 0.0
      %v584 = vsel %vm383, %v568, 0.0
      %v585 = vsel %vm384, %v569, 0.0
      %v594 = vcombine.low %v578, %v579
      %v595 = vcombine.low %v580, %v581
      %v596 = vcombine.low %v582, %v583
      %v597 = vcombine.low %v584, %v585
      %v598 = vrot.slane %v594, 2
      %v599 = vrot.slane %v595, 1
      %v600 = vsel %vm423, %v599, %v598
      %v601 = vsel %vm425, %v599, %v600
      %v602 = vsel %vm428, %v596, %v601
      %v603 = vsel %vm430, %v596, %v602
      %v604 = vrot.slane %v597, 7
      %v605 = vsel %vm433, %v604, %v603
      %v606 = vsel %vm435, %v604, %v605
      %v608 = vadd.f32 %v523, %v606
      %v609 = vsel %vm383, %v564, -3e+38
      %v610 = vsel %vm384, %v565, -3e+38
      %v611 = vsel %vm383, %v566, -3e+38
      %v612 = vsel %vm384, %v567, -3e+38
      %v613 = vsel %vm383, %v561, -3e+38
      %v614 = vsel %vm384, %v560, -3e+38
      %v615 = vsel %vm383, %v568, -3e+38
      %v616 = vsel %vm384, %v569, -3e+38
      %v625 = vcombine.low %v609, %v610
      %v626 = vcombine.low %v611, %v612
      %v627 = vcombine.low %v613, %v614
      %v628 = vcombine.low %v615, %v616
      %v629 = vrot.slane %v625, 2
      %v630 = vrot.slane %v626, 1
      %v631 = vsel %vm423, %v630, %v629
      %v632 = vsel %vm425, %v630, %v631
      %v633 = vsel %vm428, %v627, %v632
      %v634 = vsel %vm430, %v627, %v633
      %v635 = vrot.slane %v628, 7
      %v636 = vsel %vm433, %v635, %v634
      %v637 = vsel %vm435, %v635, %v636
      %v639 = vmax.f32 %v554, %v637
      %640 = vrot.lane.b32.xlu0 %v360, 1
      %v641 = vpop.permute.xlu0 %640
      %642 = vrot.lane.b32.xlu0 %v370, 1
      %v643 = vpop.permute.xlu0 %642
      %vm644 = vcmp.lt.s32.totalorder %v377, 1
      %v645 = vsel %vm644, %v641, %v643
      %v646 = vsel %vm644, %v643, %v641
      %v649 = vrot.slane %v646, 5
      %v650 = vrot.slane %v645, 5
      %v651 = vrot.slane %v646, 6
      %v652 = vrot.slane %v645, 6
      %v653 = vrot.slane %v646, 7
      %v654 = vrot.slane %v645, 7
      %v663 = vsel %vm383, %v649, 0.0
      %v664 = vsel %vm384, %v650, 0.0
      %v665 = vsel %vm383, %v651, 0.0
      %v666 = vsel %vm384, %v652, 0.0
      %v667 = vsel %vm383, %v653, 0.0
      %v668 = vsel %vm384, %v654, 0.0
      %v669 = vsel %vm383, %v646, 0.0
      %v670 = vsel %vm384, %v645, 0.0
      %v679 = vcombine.low %v663, %v664
      %v680 = vcombine.low %v665, %v666
      %v681 = vcombine.low %v667, %v668
      %v682 = vcombine.low %v669, %v670
      %v683 = vrot.slane %v679, 3
      %v684 = vrot.slane %v680, 2
      %v685 = vsel %vm423, %v684, %v683
      %v686 = vsel %vm425, %v684, %v685
      %v687 = vrot.slane %v681, 1
      %v688 = vsel %vm428, %v687, %v686
      %v689 = vsel %vm430, %v687, %v688
      %v690 = vsel %vm433, %v682, %v689
      %v691 = vsel %vm435, %v682, %v690
      %v693 = vadd.f32 %v608, %v691
      %v694 = vsel %vm383, %v649, -3e+38
      %v695 = vsel %vm384, %v650, -3e+38
      %v696 = vsel %vm383, %v651, -3e+38
      %v697 = vsel %vm384, %v652, -3e+38
      %v698 = vsel %vm383, %v653, -3e+38
      %v699 = vsel %vm384, %v654, -3e+38
      %v700 = vsel %vm383, %v646, -3e+38
      %v701 = vsel %vm384, %v645, -3e+38
      %v710 = vcombine.low %v694, %v695
      %v711 = vcombine.low %v696, %v697
      %v712 = vcombine.low %v698, %v699
      %v713 = vcombine.low %v700, %v701
      %v714 = vrot.slane %v710, 3
      %v715 = vrot.slane %v711, 2
      %v716 = vsel %vm423, %v715, %v714
      %v717 = vsel %vm425, %v715, %v716
      %v718 = vrot.slane %v712, 1
      %v719 = vsel %vm428, %v718, %v717
      %v720 = vsel %vm430, %v718, %v719
      %v721 = vsel %vm433, %v713, %v720
      %v722 = vsel %vm435, %v713, %v721
      %v724 = vmax.f32 %v639, %v722
      %725 = vrot.lane.b32.xlu0 %v360, 127
      %v726 = vpop.permute.xlu0 %725
      %727 = vrot.lane.b32.xlu0 %v370, 127
      %v728 = vpop.permute.xlu0 %727
      %vm729 = vcmp.lt.s32.totalorder %v377, 127
      %v730 = vsel %vm729, %v726, %v728
      %v731 = vsel %vm729, %v728, %v726
      %v734 = vrot.slane %v730, 3
      %v735 = vrot.slane %v731, 3
      %v736 = vrot.slane %v730, 4
      %v737 = vrot.slane %v731, 4
      %v738 = vrot.slane %v730, 5
      %v739 = vrot.slane %v731, 5
      %v740 = vrot.slane %v730, 6
      %v741 = vrot.slane %v731, 6
      %v750 = vsel %vm383, %v734, 0.0
      %v751 = vsel %vm384, %v735, 0.0
      %v752 = vsel %vm383, %v736, 0.0
      %v753 = vsel %vm384, %v737, 0.0
      %v754 = vsel %vm383, %v738, 0.0
      %v755 = vsel %vm384, %v739, 0.0
      %v756 = vsel %vm383, %v740, 0.0
      %v757 = vsel %vm384, %v741, 0.0
      %v766 = vcombine.high %v750, %v751
      %v767 = vcombine.high %v752, %v753
      %v768 = vcombine.high %v754, %v755
      %v769 = vcombine.high %v756, %v757
      %v770 = vrot.slane %v766, 1
      %v771 = vsel %vm423, %v767, %v770
      %v772 = vsel %vm425, %v767, %v771
      %v773 = vrot.slane %v768, 7
      %v774 = vsel %vm428, %v773, %v772
      %v775 = vsel %vm430, %v773, %v774
      %v776 = vrot.slane %v769, 6
      %v777 = vsel %vm433, %v776, %v775
      %v778 = vsel %vm435, %v776, %v777
      %v780 = vadd.f32 %v693, %v778
      %v781 = vsel %vm383, %v734, -3e+38
      %v782 = vsel %vm384, %v735, -3e+38
      %v783 = vsel %vm383, %v736, -3e+38
      %v784 = vsel %vm384, %v737, -3e+38
      %v785 = vsel %vm383, %v738, -3e+38
      %v786 = vsel %vm384, %v739, -3e+38
      %v787 = vsel %vm383, %v740, -3e+38
      %v788 = vsel %vm384, %v741, -3e+38
      %v797 = vcombine.high %v781, %v782
      %v798 = vcombine.high %v783, %v784
      %v799 = vcombine.high %v785, %v786
      %v800 = vcombine.high %v787, %v788
      %v801 = vrot.slane %v797, 1
      %v802 = vsel %vm423, %v798, %v801
      %v803 = vsel %vm425, %v798, %v802
      %v804 = vrot.slane %v799, 7
      %v805 = vsel %vm428, %v804, %v803
      %v806 = vsel %vm430, %v804, %v805
      %v807 = vrot.slane %v800, 6
      %v808 = vsel %vm433, %v807, %v806
      %v809 = vsel %vm435, %v807, %v808
      %v811 = vmax.f32 %v724, %v809
      %812 = vrot.lane.b32.xlu0 %v360, 113
      %v813 = vpop.permute.xlu0 %812
      %814 = vrot.lane.b32.xlu0 %v370, 113
      %v815 = vpop.permute.xlu0 %814
      %vm816 = vcmp.lt.s32.totalorder %v377, 113
      %v817 = vsel %vm816, %v813, %v815
      %v818 = vsel %vm816, %v815, %v813
      %v821 = vrot.slane %v817, 2
      %v822 = vrot.slane %v818, 2
      %v823 = vrot.slane %v817, 3
      %v824 = vrot.slane %v818, 3
      %v825 = vrot.slane %v817, 4
      %v826 = vrot.slane %v818, 4
      %v827 = vrot.slane %v817, 5
      %v828 = vrot.slane %v818, 5
      %v837 = vsel %vm383, %v821, 0.0
      %v838 = vsel %vm384, %v822, 0.0
      %v839 = vsel %vm383, %v823, 0.0
      %v840 = vsel %vm384, %v824, 0.0
      %v841 = vsel %vm383, %v825, 0.0
      %v842 = vsel %vm384, %v826, 0.0
      %v843 = vsel %vm383, %v827, 0.0
      %v844 = vsel %vm384, %v828, 0.0
      %v853 = vcombine.high %v837, %v838
      %v854 = vcombine.high %v839, %v840
      %v855 = vcombine.high %v841, %v842
      %v856 = vcombine.high %v843, %v844
      %v857 = vrot.slane %v853, 2
      %v858 = vrot.slane %v854, 1
      %v859 = vsel %vm423, %v858, %v857
      %v860 = vsel %vm425, %v858, %v859
      %v861 = vsel %vm428, %v855, %v860
      %v862 = vsel %vm430, %v855, %v861
      %v863 = vrot.slane %v856, 7
      %v864 = vsel %vm433, %v863, %v862
      %v865 = vsel %vm435, %v863, %v864
      %v867 = vadd.f32 %v780, %v865
      %v868 = vsel %vm383, %v821, -3e+38
      %v869 = vsel %vm384, %v822, -3e+38
      %v870 = vsel %vm383, %v823, -3e+38
      %v871 = vsel %vm384, %v824, -3e+38
      %v872 = vsel %vm383, %v825, -3e+38
      %v873 = vsel %vm384, %v826, -3e+38
      %v874 = vsel %vm383, %v827, -3e+38
      %v875 = vsel %vm384, %v828, -3e+38
      %v884 = vcombine.high %v868, %v869
      %v885 = vcombine.high %v870, %v871
      %v886 = vcombine.high %v872, %v873
      %v887 = vcombine.high %v874, %v875
      %v888 = vrot.slane %v884, 2
      %v889 = vrot.slane %v885, 1
      %v890 = vsel %vm423, %v889, %v888
      %v891 = vsel %vm425, %v889, %v890
      %v892 = vsel %vm428, %v886, %v891
      %v893 = vsel %vm430, %v886, %v892
      %v894 = vrot.slane %v887, 7
      %v895 = vsel %vm433, %v894, %v893
      %v896 = vsel %vm435, %v894, %v895
      %v898 = vmax.f32 %v811, %v896
      %899 = vrot.lane.b32.xlu0 %v360, 112
      %v900 = vpop.permute.xlu0 %899
      %901 = vrot.lane.b32.xlu0 %v370, 112
      %v902 = vpop.permute.xlu0 %901
      %vm903 = vcmp.lt.s32.totalorder %v377, 112
      %v904 = vsel %vm903, %v900, %v902
      %v905 = vsel %vm903, %v902, %v900
      %v908 = vrot.slane %v904, 1
      %v909 = vrot.slane %v905, 1
      %v910 = vrot.slane %v904, 2
      %v911 = vrot.slane %v905, 2
      %v912 = vrot.slane %v904, 3
      %v913 = vrot.slane %v905, 3
      %v914 = vrot.slane %v904, 4
      %v915 = vrot.slane %v905, 4
      %v924 = vsel %vm383, %v908, 0.0
      %v925 = vsel %vm384, %v909, 0.0
      %v926 = vsel %vm383, %v910, 0.0
      %v927 = vsel %vm384, %v911, 0.0
      %v928 = vsel %vm383, %v912, 0.0
      %v929 = vsel %vm384, %v913, 0.0
      %v930 = vsel %vm383, %v914, 0.0
      %v931 = vsel %vm384, %v915, 0.0
      %v940 = vcombine.high %v924, %v925
      %v941 = vcombine.high %v926, %v927
      %v942 = vcombine.high %v928, %v929
      %v943 = vcombine.high %v930, %v931
      %v944 = vrot.slane %v940, 3
      %v945 = vrot.slane %v941, 2
      %v946 = vsel %vm423, %v945, %v944
      %v947 = vsel %vm425, %v945, %v946
      %v948 = vrot.slane %v942, 1
      %v949 = vsel %vm428, %v948, %v947
      %v950 = vsel %vm430, %v948, %v949
      %v951 = vsel %vm433, %v943, %v950
      %v952 = vsel %vm435, %v943, %v951
      %v954 = vadd.f32 %v867, %v952
      %v955 = vsel %vm383, %v908, -3e+38
      %v956 = vsel %vm384, %v909, -3e+38
      %v957 = vsel %vm383, %v910, -3e+38
      %v958 = vsel %vm384, %v911, -3e+38
      %v959 = vsel %vm383, %v912, -3e+38
      %v960 = vsel %vm384, %v913, -3e+38
      %v961 = vsel %vm383, %v914, -3e+38
      %v962 = vsel %vm384, %v915, -3e+38
      %v971 = vcombine.high %v955, %v956
      %v972 = vcombine.high %v957, %v958
      %v973 = vcombine.high %v959, %v960
      %v974 = vcombine.high %v961, %v962
      %v975 = vrot.slane %v971, 3
      %v976 = vrot.slane %v972, 2
      %v977 = vsel %vm423, %v976, %v975
      %v978 = vsel %vm425, %v976, %v977
      %v979 = vrot.slane %v973, 1
      %v980 = vsel %vm428, %v979, %v978
      %v981 = vsel %vm430, %v979, %v980
      %v982 = vsel %vm433, %v974, %v981
      %v983 = vsel %vm435, %v974, %v982
      %v985 = vmax.f32 %v898, %v983
      %986 = vrot.lane.b32.xlu0 %v360, 111
      %v987 = vpop.permute.xlu0 %986
      %988 = vrot.lane.b32.xlu0 %v370, 111
      %v989 = vpop.permute.xlu0 %988
      %vm990 = vcmp.lt.s32.totalorder %v377, 111
      %v991 = vsel %vm990, %v987, %v989
      %v992 = vsel %vm990, %v989, %v987
      %v993 = vsel %vm367, 1, 0
      %v994 = vsel %vm368, 1, 0
      %vm995 = vcmp.eq.s32.totalorder %v993, 1
      %vm996 = vcmp.eq.s32.totalorder %v994, 1
      %v999 = vrot.slane %v991, 1
      %v1000 = vrot.slane %v992, 1
      %v1001 = vrot.slane %v991, 2
      %v1002 = vrot.slane %v992, 2
      %v1003 = vrot.slane %v991, 3
      %v1004 = vrot.slane %v992, 3
      %v1013 = vsel %vm995, %v991, 0.0
      %v1014 = vsel %vm996, %v992, 0.0
      %v1015 = vsel %vm995, %v999, 0.0
      %v1016 = vsel %vm996, %v1000, 0.0
      %v1017 = vsel %vm995, %v1001, 0.0
      %v1018 = vsel %vm996, %v1002, 0.0
      %v1019 = vsel %vm995, %v1003, 0.0
      %v1020 = vsel %vm996, %v1004, 0.0
      %v1029 = vcombine.low %v1013, %v1014
      %v1030 = vcombine.low %v1015, %v1016
      %v1031 = vcombine.low %v1017, %v1018
      %v1032 = vcombine.low %v1019, %v1020
      %v1033 = vrot.slane %v1030, 7
      %v1034 = vsel %vm423, %v1033, %v1029
      %v1035 = vsel %vm425, %v1033, %v1034
      %v1036 = vrot.slane %v1031, 6
      %v1037 = vsel %vm428, %v1036, %v1035
      %v1038 = vsel %vm430, %v1036, %v1037
      %v1039 = vrot.slane %v1032, 5
      %v1040 = vsel %vm433, %v1039, %v1038
      %v1041 = vsel %vm435, %v1039, %v1040
      %v1043 = vadd.f32 %v954, %v1041
      %v1044 = vsel %vm995, %v991, -3e+38
      %v1045 = vsel %vm996, %v992, -3e+38
      %v1046 = vsel %vm995, %v999, -3e+38
      %v1047 = vsel %vm996, %v1000, -3e+38
      %v1048 = vsel %vm995, %v1001, -3e+38
      %v1049 = vsel %vm996, %v1002, -3e+38
      %v1050 = vsel %vm995, %v1003, -3e+38
      %v1051 = vsel %vm996, %v1004, -3e+38
      %v1060 = vcombine.low %v1044, %v1045
      %v1061 = vcombine.low %v1046, %v1047
      %v1062 = vcombine.low %v1048, %v1049
      %v1063 = vcombine.low %v1050, %v1051
      %v1064 = vrot.slane %v1061, 7
      %v1065 = vsel %vm423, %v1064, %v1060
      %v1066 = vsel %vm425, %v1064, %v1065
      %v1067 = vrot.slane %v1062, 6
      %v1068 = vsel %vm428, %v1067, %v1066
      %v1069 = vsel %vm430, %v1067, %v1068
      %v1070 = vrot.slane %v1063, 5
      %v1071 = vsel %vm433, %v1070, %v1069
      %v1072 = vsel %vm435, %v1070, %v1071
      %v1074 = vmax.f32 %v985, %v1072
      %v1075 = vmul.f32 %v1043, 0.11111111
      %v1076 = vsub.f32 %v360, %v1075
      %v1077 = vsub.f32 %v360, %v1074
      %v1079 = vcombine.high %v1076, %v1076
      %v1082 = vcombine.low %v1077, %v1077
      %vm1084 = vcmask 1043456
      %v1085 = vsel %vm1084, %v1076, %v1082
      %v1086 = vsel %vm1084, %v1079, %v1077
      %1087 = vrot.lane.b32.xlu0 %v1085, 17
      %v1088 = vpop.permute.xlu0 %1087
      %1089 = vrot.lane.b32.xlu0 %v1086, 17
      %v1090 = vpop.permute.xlu0 %1089
      %v1091 = vsel %vm378, %v1088, %v1090
      %v1092 = vsel %vm378, %v1090, %v1088
      %v1095 = vrot.slane %v1092, 1
      %v1096 = vrot.slane %v1091, 1
      %v1097 = vrot.slane %v1092, 2
      %v1098 = vrot.slane %v1091, 2
      %v1099 = vrot.slane %v1092, 3
      %v1100 = vrot.slane %v1091, 3
      %v1101 = vrot.slane %v1092, 4
      %v1102 = vrot.slane %v1091, 4
      %v1103 = vrot.slane %v1092, 5
      %v1104 = vrot.slane %v1091, 5
      %v1105 = vrot.slane %v1092, 6
      %v1106 = vrot.slane %v1091, 6
      %v1107 = vrot.slane %v1092, 7
      %v1108 = vrot.slane %v1091, 7
      %v1125 = vsel %vm383, %v1092, 0.0
      %v1126 = vsel %vm384, %v1091, 0.0
      %v1127 = vsel %vm383, %v1095, 0.0
      %v1128 = vsel %vm384, %v1096, 0.0
      %v1129 = vsel %vm383, %v1097, 0.0
      %v1130 = vsel %vm384, %v1098, 0.0
      %v1131 = vsel %vm383, %v1099, 0.0
      %v1132 = vsel %vm384, %v1100, 0.0
      %v1133 = vsel %vm383, %v1101, 0.0
      %v1134 = vsel %vm384, %v1102, 0.0
      %v1135 = vsel %vm383, %v1103, 0.0
      %v1136 = vsel %vm384, %v1104, 0.0
      %v1137 = vsel %vm383, %v1105, 0.0
      %v1138 = vsel %vm384, %v1106, 0.0
      %v1139 = vsel %vm383, %v1107, 0.0
      %v1140 = vsel %vm384, %v1108, 0.0
      %1141 = vrot.lane.b32.xlu0 %v1085, 16
      %v1142 = vpop.permute.xlu0 %1141
      %1143 = vrot.lane.b32.xlu0 %v1086, 16
      %v1144 = vpop.permute.xlu0 %1143
      %v1145 = vsel %vm474, %v1142, %v1144
      %v1146 = vsel %vm474, %v1144, %v1142
      %v1149 = vrot.slane %v1146, 7
      %v1150 = vrot.slane %v1145, 7
      %v1151 = vrot.slane %v1146, 1
      %v1152 = vrot.slane %v1145, 1
      %v1153 = vrot.slane %v1146, 2
      %v1154 = vrot.slane %v1145, 2
      %v1155 = vrot.slane %v1146, 3
      %v1156 = vrot.slane %v1145, 3
      %v1157 = vrot.slane %v1146, 4
      %v1158 = vrot.slane %v1145, 4
      %v1159 = vrot.slane %v1146, 5
      %v1160 = vrot.slane %v1145, 5
      %v1161 = vrot.slane %v1146, 6
      %v1162 = vrot.slane %v1145, 6
      %v1179 = vsel %vm383, %v1149, 0.0
      %v1180 = vsel %vm384, %v1150, 0.0
      %v1181 = vsel %vm383, %v1146, 0.0
      %v1182 = vsel %vm384, %v1145, 0.0
      %v1183 = vsel %vm383, %v1151, 0.0
      %v1184 = vsel %vm384, %v1152, 0.0
      %v1185 = vsel %vm383, %v1153, 0.0
      %v1186 = vsel %vm384, %v1154, 0.0
      %v1187 = vsel %vm383, %v1155, 0.0
      %v1188 = vsel %vm384, %v1156, 0.0
      %v1189 = vsel %vm383, %v1157, 0.0
      %v1190 = vsel %vm384, %v1158, 0.0
      %v1191 = vsel %vm383, %v1159, 0.0
      %v1192 = vsel %vm384, %v1160, 0.0
      %v1193 = vsel %vm383, %v1161, 0.0
      %v1194 = vsel %vm384, %v1162, 0.0
      %1195 = vrot.lane.b32.xlu0 %v1085, 15
      %v1196 = vpop.permute.xlu0 %1195
      %1197 = vrot.lane.b32.xlu0 %v1086, 15
      %v1198 = vpop.permute.xlu0 %1197
      %v1199 = vsel %vm559, %v1196, %v1198
      %v1200 = vsel %vm559, %v1198, %v1196
      %v1203 = vrot.slane %v1200, 6
      %v1204 = vrot.slane %v1199, 6
      %v1205 = vrot.slane %v1200, 7
      %v1206 = vrot.slane %v1199, 7
      %v1207 = vrot.slane %v1200, 1
      %v1208 = vrot.slane %v1199, 1
      %v1209 = vrot.slane %v1200, 2
      %v1210 = vrot.slane %v1199, 2
      %v1211 = vrot.slane %v1200, 3
      %v1212 = vrot.slane %v1199, 3
      %v1213 = vrot.slane %v1200, 4
      %v1214 = vrot.slane %v1199, 4
      %v1215 = vrot.slane %v1200, 5
      %v1216 = vrot.slane %v1199, 5
      %v1233 = vsel %vm383, %v1203, 0.0
      %v1234 = vsel %vm384, %v1204, 0.0
      %v1235 = vsel %vm383, %v1205, 0.0
      %v1236 = vsel %vm384, %v1206, 0.0
      %v1237 = vsel %vm383, %v1200, 0.0
      %v1238 = vsel %vm384, %v1199, 0.0
      %v1239 = vsel %vm383, %v1207, 0.0
      %v1240 = vsel %vm384, %v1208, 0.0
      %v1241 = vsel %vm383, %v1209, 0.0
      %v1242 = vsel %vm384, %v1210, 0.0
      %v1243 = vsel %vm383, %v1211, 0.0
      %v1244 = vsel %vm384, %v1212, 0.0
      %v1245 = vsel %vm383, %v1213, 0.0
      %v1246 = vsel %vm384, %v1214, 0.0
      %v1247 = vsel %vm383, %v1215, 0.0
      %v1248 = vsel %vm384, %v1216, 0.0
      %1249 = vrot.lane.b32.xlu0 %v1085, 1
      %v1250 = vpop.permute.xlu0 %1249
      %1251 = vrot.lane.b32.xlu0 %v1086, 1
      %v1252 = vpop.permute.xlu0 %1251
      %v1253 = vsel %vm644, %v1250, %v1252
      %v1254 = vsel %vm644, %v1252, %v1250
      %v1257 = vrot.slane %v1254, 5
      %v1258 = vrot.slane %v1253, 5
      %v1259 = vrot.slane %v1254, 6
      %v1260 = vrot.slane %v1253, 6
      %v1261 = vrot.slane %v1254, 7
      %v1262 = vrot.slane %v1253, 7
      %v1263 = vrot.slane %v1254, 1
      %v1264 = vrot.slane %v1253, 1
      %v1265 = vrot.slane %v1254, 2
      %v1266 = vrot.slane %v1253, 2
      %v1267 = vrot.slane %v1254, 3
      %v1268 = vrot.slane %v1253, 3
      %v1269 = vrot.slane %v1254, 4
      %v1270 = vrot.slane %v1253, 4
      %v1287 = vsel %vm383, %v1257, 0.0
      %v1288 = vsel %vm384, %v1258, 0.0
      %v1289 = vsel %vm383, %v1259, 0.0
      %v1290 = vsel %vm384, %v1260, 0.0
      %v1291 = vsel %vm383, %v1261, 0.0
      %v1292 = vsel %vm384, %v1262, 0.0
      %v1293 = vsel %vm383, %v1254, 0.0
      %v1294 = vsel %vm384, %v1253, 0.0
      %v1295 = vsel %vm383, %v1263, 0.0
      %v1296 = vsel %vm384, %v1264, 0.0
      %v1297 = vsel %vm383, %v1265, 0.0
      %v1298 = vsel %vm384, %v1266, 0.0
      %v1299 = vsel %vm383, %v1267, 0.0
      %v1300 = vsel %vm384, %v1268, 0.0
      %v1301 = vsel %vm383, %v1269, 0.0
      %v1302 = vsel %vm384, %v1270, 0.0
      %1303 = vrot.lane.b32.xlu0 %v1085, 127
      %v1304 = vpop.permute.xlu0 %1303
      %1305 = vrot.lane.b32.xlu0 %v1086, 127
      %v1306 = vpop.permute.xlu0 %1305
      %v1307 = vsel %vm729, %v1304, %v1306
      %v1308 = vsel %vm729, %v1306, %v1304
      %v1311 = vrot.slane %v1307, 3
      %v1312 = vrot.slane %v1308, 3
      %v1313 = vrot.slane %v1307, 4
      %v1314 = vrot.slane %v1308, 4
      %v1315 = vrot.slane %v1307, 5
      %v1316 = vrot.slane %v1308, 5
      %v1317 = vrot.slane %v1307, 6
      %v1318 = vrot.slane %v1308, 6
      %v1319 = vrot.slane %v1307, 7
      %v1320 = vrot.slane %v1308, 7
      %v1321 = vrot.slane %v1307, 1
      %v1322 = vrot.slane %v1308, 1
      %v1323 = vrot.slane %v1307, 2
      %v1324 = vrot.slane %v1308, 2
      %v1341 = vsel %vm383, %v1311, 0.0
      %v1342 = vsel %vm384, %v1312, 0.0
      %v1343 = vsel %vm383, %v1313, 0.0
      %v1344 = vsel %vm384, %v1314, 0.0
      %v1345 = vsel %vm383, %v1315, 0.0
      %v1346 = vsel %vm384, %v1316, 0.0
      %v1347 = vsel %vm383, %v1317, 0.0
      %v1348 = vsel %vm384, %v1318, 0.0
      %v1349 = vsel %vm383, %v1319, 0.0
      %v1350 = vsel %vm384, %v1320, 0.0
      %v1351 = vsel %vm383, %v1307, 0.0
      %v1352 = vsel %vm384, %v1308, 0.0
      %v1353 = vsel %vm383, %v1321, 0.0
      %v1354 = vsel %vm384, %v1322, 0.0
      %v1355 = vsel %vm383, %v1323, 0.0
      %v1356 = vsel %vm384, %v1324, 0.0
      %1357 = vrot.lane.b32.xlu0 %v1085, 113
      %v1358 = vpop.permute.xlu0 %1357
      %1359 = vrot.lane.b32.xlu0 %v1086, 113
      %v1360 = vpop.permute.xlu0 %1359
      %v1361 = vsel %vm816, %v1358, %v1360
      %v1362 = vsel %vm816, %v1360, %v1358
      %v1365 = vrot.slane %v1361, 2
      %v1366 = vrot.slane %v1362, 2
      %v1367 = vrot.slane %v1361, 3
      %v1368 = vrot.slane %v1362, 3
      %v1369 = vrot.slane %v1361, 4
      %v1370 = vrot.slane %v1362, 4
      %v1371 = vrot.slane %v1361, 5
      %v1372 = vrot.slane %v1362, 5
      %v1373 = vrot.slane %v1361, 6
      %v1374 = vrot.slane %v1362, 6
      %v1375 = vrot.slane %v1361, 7
      %v1376 = vrot.slane %v1362, 7
      %v1377 = vrot.slane %v1361, 1
      %v1378 = vrot.slane %v1362, 1
      %v1395 = vsel %vm383, %v1365, 0.0
      %v1396 = vsel %vm384, %v1366, 0.0
      %v1397 = vsel %vm383, %v1367, 0.0
      %v1398 = vsel %vm384, %v1368, 0.0
      %v1399 = vsel %vm383, %v1369, 0.0
      %v1400 = vsel %vm384, %v1370, 0.0
      %v1401 = vsel %vm383, %v1371, 0.0
      %v1402 = vsel %vm384, %v1372, 0.0
      %v1403 = vsel %vm383, %v1373, 0.0
      %v1404 = vsel %vm384, %v1374, 0.0
      %v1405 = vsel %vm383, %v1375, 0.0
      %v1406 = vsel %vm384, %v1376, 0.0
      %v1407 = vsel %vm383, %v1361, 0.0
      %v1408 = vsel %vm384, %v1362, 0.0
      %v1409 = vsel %vm383, %v1377, 0.0
      %v1410 = vsel %vm384, %v1378, 0.0
      %1411 = vrot.lane.b32.xlu0 %v1085, 112
      %v1412 = vpop.permute.xlu0 %1411
      %1413 = vrot.lane.b32.xlu0 %v1086, 112
      %v1414 = vpop.permute.xlu0 %1413
      %v1415 = vsel %vm903, %v1412, %v1414
      %v1416 = vsel %vm903, %v1414, %v1412
      %v1419 = vrot.slane %v1415, 1
      %v1420 = vrot.slane %v1416, 1
      %v1421 = vrot.slane %v1415, 2
      %v1422 = vrot.slane %v1416, 2
      %v1423 = vrot.slane %v1415, 3
      %v1424 = vrot.slane %v1416, 3
      %v1425 = vrot.slane %v1415, 4
      %v1426 = vrot.slane %v1416, 4
      %v1427 = vrot.slane %v1415, 5
      %v1428 = vrot.slane %v1416, 5
      %v1429 = vrot.slane %v1415, 6
      %v1430 = vrot.slane %v1416, 6
      %v1431 = vrot.slane %v1415, 7
      %v1432 = vrot.slane %v1416, 7
      %v1449 = vsel %vm383, %v1419, 0.0
      %v1450 = vsel %vm384, %v1420, 0.0
      %v1451 = vsel %vm383, %v1421, 0.0
      %v1452 = vsel %vm384, %v1422, 0.0
      %v1453 = vsel %vm383, %v1423, 0.0
      %v1454 = vsel %vm384, %v1424, 0.0
      %v1455 = vsel %vm383, %v1425, 0.0
      %v1456 = vsel %vm384, %v1426, 0.0
      %v1457 = vsel %vm383, %v1427, 0.0
      %v1458 = vsel %vm384, %v1428, 0.0
      %v1459 = vsel %vm383, %v1429, 0.0
      %v1460 = vsel %vm384, %v1430, 0.0
      %v1461 = vsel %vm383, %v1431, 0.0
      %v1462 = vsel %vm384, %v1432, 0.0
      %v1463 = vsel %vm383, %v1415, 0.0
      %v1464 = vsel %vm384, %v1416, 0.0
      %1465 = vrot.lane.b32.xlu0 %v1085, 111
      %v1466 = vpop.permute.xlu0 %1465
      %1467 = vrot.lane.b32.xlu0 %v1086, 111
      %v1468 = vpop.permute.xlu0 %1467
      %v1469 = vsel %vm990, %v1466, %v1468
      %v1470 = vsel %vm990, %v1468, %v1466
      %v1473 = vrot.slane %v1469, 1
      %v1474 = vrot.slane %v1470, 1
      %v1475 = vrot.slane %v1469, 2
      %v1476 = vrot.slane %v1470, 2
      %v1477 = vrot.slane %v1469, 3
      %v1478 = vrot.slane %v1470, 3
      %v1479 = vrot.slane %v1469, 4
      %v1480 = vrot.slane %v1470, 4
      %v1481 = vrot.slane %v1469, 5
      %v1482 = vrot.slane %v1470, 5
      %v1483 = vrot.slane %v1469, 6
      %v1484 = vrot.slane %v1470, 6
      %v1485 = vrot.slane %v1469, 7
      %v1486 = vrot.slane %v1470, 7
      %v1503 = vsel %vm995, %v1469, 0.0
      %v1504 = vsel %vm996, %v1470, 0.0
      %v1505 = vsel %vm995, %v1473, 0.0
      %v1506 = vsel %vm996, %v1474, 0.0
      %v1507 = vsel %vm995, %v1475, 0.0
      %v1508 = vsel %vm996, %v1476, 0.0
      %v1509 = vsel %vm995, %v1477, 0.0
      %v1510 = vsel %vm996, %v1478, 0.0
      %v1511 = vsel %vm995, %v1479, 0.0
      %v1512 = vsel %vm996, %v1480, 0.0
      %v1513 = vsel %vm995, %v1481, 0.0
      %v1514 = vsel %vm996, %v1482, 0.0
      %v1515 = vsel %vm995, %v1483, 0.0
      %v1516 = vsel %vm996, %v1484, 0.0
      %v1517 = vsel %vm995, %v1485, 0.0
      %v1518 = vsel %vm996, %v1486, 0.0
      %v1535 = vrot.slane %v1127, 7
      %v1536 = vsel %vm423, %v1535, %v1125
      %v1537 = vrot.slane %v1129, 6
      %v1538 = vsel %vm428, %v1537, %v1536
      %v1539 = vrot.slane %v1131, 5
      %v1540 = vsel %vm433, %v1539, %v1538
      %v1541 = vrot.slane %v1133, 4
      %v1542 = vsel %vm421, %v1541, %v1540
      %v1543 = vrot.slane %v1135, 3
      %v1544 = vsel %vm425, %v1543, %v1542
      %v1545 = vrot.slane %v1137, 2
      %v1546 = vsel %vm430, %v1545, %v1544
      %v1547 = vrot.slane %v1139, 1
      %v1548 = vsel %vm435, %v1547, %v1546
      %v1549 = vrot.slane %v1128, 7
      %v1550 = vsel %vm423, %v1549, %v1126
      %v1551 = vrot.slane %v1130, 6
      %v1552 = vsel %vm428, %v1551, %v1550
      %v1553 = vrot.slane %v1132, 5
      %v1554 = vsel %vm433, %v1553, %v1552
      %v1555 = vrot.slane %v1134, 4
      %v1556 = vsel %vm421, %v1555, %v1554
      %v1557 = vrot.slane %v1136, 3
      %v1558 = vsel %vm425, %v1557, %v1556
      %v1559 = vrot.slane %v1138, 2
      %v1560 = vsel %vm430, %v1559, %v1558
      %v1561 = vrot.slane %v1140, 1
      %v1562 = vsel %vm435, %v1561, %v1560
      %v1581 = vrot.slane %v1179, 1
      %v1582 = vsel %vm423, %v1181, %v1581
      %v1583 = vrot.slane %v1183, 7
      %v1584 = vsel %vm428, %v1583, %v1582
      %v1585 = vrot.slane %v1185, 6
      %v1586 = vsel %vm433, %v1585, %v1584
      %v1587 = vrot.slane %v1187, 5
      %v1588 = vsel %vm421, %v1587, %v1586
      %v1589 = vrot.slane %v1189, 4
      %v1590 = vsel %vm425, %v1589, %v1588
      %v1591 = vrot.slane %v1191, 3
      %v1592 = vsel %vm430, %v1591, %v1590
      %v1593 = vrot.slane %v1193, 2
      %v1594 = vsel %vm435, %v1593, %v1592
      %v1595 = vrot.slane %v1180, 1
      %v1596 = vsel %vm423, %v1182, %v1595
      %v1597 = vrot.slane %v1184, 7
      %v1598 = vsel %vm428, %v1597, %v1596
      %v1599 = vrot.slane %v1186, 6
      %v1600 = vsel %vm433, %v1599, %v1598
      %v1601 = vrot.slane %v1188, 5
      %v1602 = vsel %vm421, %v1601, %v1600
      %v1603 = vrot.slane %v1190, 4
      %v1604 = vsel %vm425, %v1603, %v1602
      %v1605 = vrot.slane %v1192, 3
      %v1606 = vsel %vm430, %v1605, %v1604
      %v1607 = vrot.slane %v1194, 2
      %v1608 = vsel %vm435, %v1607, %v1606
      %v1627 = vrot.slane %v1233, 2
      %v1628 = vrot.slane %v1235, 1
      %v1629 = vsel %vm423, %v1628, %v1627
      %v1630 = vsel %vm428, %v1237, %v1629
      %v1631 = vrot.slane %v1239, 7
      %v1632 = vsel %vm433, %v1631, %v1630
      %v1633 = vrot.slane %v1241, 6
      %v1634 = vsel %vm421, %v1633, %v1632
      %v1635 = vrot.slane %v1243, 5
      %v1636 = vsel %vm425, %v1635, %v1634
      %v1637 = vrot.slane %v1245, 4
      %v1638 = vsel %vm430, %v1637, %v1636
      %v1639 = vrot.slane %v1247, 3
      %v1640 = vsel %vm435, %v1639, %v1638
      %v1641 = vrot.slane %v1234, 2
      %v1642 = vrot.slane %v1236, 1
      %v1643 = vsel %vm423, %v1642, %v1641
      %v1644 = vsel %vm428, %v1238, %v1643
      %v1645 = vrot.slane %v1240, 7
      %v1646 = vsel %vm433, %v1645, %v1644
      %v1647 = vrot.slane %v1242, 6
      %v1648 = vsel %vm421, %v1647, %v1646
      %v1649 = vrot.slane %v1244, 5
      %v1650 = vsel %vm425, %v1649, %v1648
      %v1651 = vrot.slane %v1246, 4
      %v1652 = vsel %vm430, %v1651, %v1650
      %v1653 = vrot.slane %v1248, 3
      %v1654 = vsel %vm435, %v1653, %v1652
      %v1673 = vrot.slane %v1287, 3
      %v1674 = vrot.slane %v1289, 2
      %v1675 = vsel %vm423, %v1674, %v1673
      %v1676 = vrot.slane %v1291, 1
      %v1677 = vsel %vm428, %v1676, %v1675
      %v1678 = vsel %vm433, %v1293, %v1677
      %v1679 = vrot.slane %v1295, 7
      %v1680 = vsel %vm421, %v1679, %v1678
      %v1681 = vrot.slane %v1297, 6
      %v1682 = vsel %vm425, %v1681, %v1680
      %v1683 = vrot.slane %v1299, 5
      %v1684 = vsel %vm430, %v1683, %v1682
      %v1685 = vrot.slane %v1301, 4
      %v1686 = vsel %vm435, %v1685, %v1684
      %v1687 = vrot.slane %v1288, 3
      %v1688 = vrot.slane %v1290, 2
      %v1689 = vsel %vm423, %v1688, %v1687
      %v1690 = vrot.slane %v1292, 1
      %v1691 = vsel %vm428, %v1690, %v1689
      %v1692 = vsel %vm433, %v1294, %v1691
      %v1693 = vrot.slane %v1296, 7
      %v1694 = vsel %vm421, %v1693, %v1692
      %v1695 = vrot.slane %v1298, 6
      %v1696 = vsel %vm425, %v1695, %v1694
      %v1697 = vrot.slane %v1300, 5
      %v1698 = vsel %vm430, %v1697, %v1696
      %v1699 = vrot.slane %v1302, 4
      %v1700 = vsel %vm435, %v1699, %v1698
      %v1719 = vrot.slane %v1341, 5
      %v1720 = vrot.slane %v1343, 4
      %v1721 = vsel %vm423, %v1720, %v1719
      %v1722 = vrot.slane %v1345, 3
      %v1723 = vsel %vm428, %v1722, %v1721
      %v1724 = vrot.slane %v1347, 2
      %v1725 = vsel %vm433, %v1724, %v1723
      %v1726 = vrot.slane %v1349, 1
      %v1727 = vsel %vm421, %v1726, %v1725
      %v1728 = vsel %vm425, %v1351, %v1727
      %v1729 = vrot.slane %v1353, 7
      %v1730 = vsel %vm430, %v1729, %v1728
      %v1731 = vrot.slane %v1355, 6
      %v1732 = vsel %vm435, %v1731, %v1730
      %v1733 = vrot.slane %v1342, 5
      %v1734 = vrot.slane %v1344, 4
      %v1735 = vsel %vm423, %v1734, %v1733
      %v1736 = vrot.slane %v1346, 3
      %v1737 = vsel %vm428, %v1736, %v1735
      %v1738 = vrot.slane %v1348, 2
      %v1739 = vsel %vm433, %v1738, %v1737
      %v1740 = vrot.slane %v1350, 1
      %v1741 = vsel %vm421, %v1740, %v1739
      %v1742 = vsel %vm425, %v1352, %v1741
      %v1743 = vrot.slane %v1354, 7
      %v1744 = vsel %vm430, %v1743, %v1742
      %v1745 = vrot.slane %v1356, 6
      %v1746 = vsel %vm435, %v1745, %v1744
      %v1765 = vrot.slane %v1395, 6
      %v1766 = vrot.slane %v1397, 5
      %v1767 = vsel %vm423, %v1766, %v1765
      %v1768 = vrot.slane %v1399, 4
      %v1769 = vsel %vm428, %v1768, %v1767
      %v1770 = vrot.slane %v1401, 3
      %v1771 = vsel %vm433, %v1770, %v1769
      %v1772 = vrot.slane %v1403, 2
      %v1773 = vsel %vm421, %v1772, %v1771
      %v1774 = vrot.slane %v1405, 1
      %v1775 = vsel %vm425, %v1774, %v1773
      %v1776 = vsel %vm430, %v1407, %v1775
      %v1777 = vrot.slane %v1409, 7
      %v1778 = vsel %vm435, %v1777, %v1776
      %v1779 = vrot.slane %v1396, 6
      %v1780 = vrot.slane %v1398, 5
      %v1781 = vsel %vm423, %v1780, %v1779
      %v1782 = vrot.slane %v1400, 4
      %v1783 = vsel %vm428, %v1782, %v1781
      %v1784 = vrot.slane %v1402, 3
      %v1785 = vsel %vm433, %v1784, %v1783
      %v1786 = vrot.slane %v1404, 2
      %v1787 = vsel %vm421, %v1786, %v1785
      %v1788 = vrot.slane %v1406, 1
      %v1789 = vsel %vm425, %v1788, %v1787
      %v1790 = vsel %vm430, %v1408, %v1789
      %v1791 = vrot.slane %v1410, 7
      %v1792 = vsel %vm435, %v1791, %v1790
      %v1811 = vrot.slane %v1449, 7
      %v1812 = vrot.slane %v1451, 6
      %v1813 = vsel %vm423, %v1812, %v1811
      %v1814 = vrot.slane %v1453, 5
      %v1815 = vsel %vm428, %v1814, %v1813
      %v1816 = vrot.slane %v1455, 4
      %v1817 = vsel %vm433, %v1816, %v1815
      %v1818 = vrot.slane %v1457, 3
      %v1819 = vsel %vm421, %v1818, %v1817
      %v1820 = vrot.slane %v1459, 2
      %v1821 = vsel %vm425, %v1820, %v1819
      %v1822 = vrot.slane %v1461, 1
      %v1823 = vsel %vm430, %v1822, %v1821
      %v1824 = vsel %vm435, %v1463, %v1823
      %v1825 = vrot.slane %v1450, 7
      %v1826 = vrot.slane %v1452, 6
      %v1827 = vsel %vm423, %v1826, %v1825
      %v1828 = vrot.slane %v1454, 5
      %v1829 = vsel %vm428, %v1828, %v1827
      %v1830 = vrot.slane %v1456, 4
      %v1831 = vsel %vm433, %v1830, %v1829
      %v1832 = vrot.slane %v1458, 3
      %v1833 = vsel %vm421, %v1832, %v1831
      %v1834 = vrot.slane %v1460, 2
      %v1835 = vsel %vm425, %v1834, %v1833
      %v1836 = vrot.slane %v1462, 1
      %v1837 = vsel %vm430, %v1836, %v1835
      %v1838 = vsel %vm435, %v1464, %v1837
      %v1857 = vrot.slane %v1505, 7
      %v1858 = vsel %vm423, %v1857, %v1503
      %v1859 = vrot.slane %v1507, 6
      %v1860 = vsel %vm428, %v1859, %v1858
      %v1861 = vrot.slane %v1509, 5
      %v1862 = vsel %vm433, %v1861, %v1860
      %v1863 = vrot.slane %v1511, 4
      %v1864 = vsel %vm421, %v1863, %v1862
      %v1865 = vrot.slane %v1513, 3
      %v1866 = vsel %vm425, %v1865, %v1864
      %v1867 = vrot.slane %v1515, 2
      %v1868 = vsel %vm430, %v1867, %v1866
      %v1869 = vrot.slane %v1517, 1
      %v1870 = vsel %vm435, %v1869, %v1868
      %v1871 = vrot.slane %v1506, 7
      %v1872 = vsel %vm423, %v1871, %v1504
      %v1873 = vrot.slane %v1508, 6
      %v1874 = vsel %vm428, %v1873, %v1872
      %v1875 = vrot.slane %v1510, 5
      %v1876 = vsel %vm433, %v1875, %v1874
      %v1877 = vrot.slane %v1512, 4
      %v1878 = vsel %vm421, %v1877, %v1876
      %v1879 = vrot.slane %v1514, 3
      %v1880 = vsel %vm425, %v1879, %v1878
      %v1881 = vrot.slane %v1516, 2
      %v1882 = vsel %vm430, %v1881, %v1880
      %v1883 = vrot.slane %v1518, 1
      %v1884 = vsel %vm435, %v1883, %v1882
      %v1887 = vld [vmem:[%s2] sm:$0xff]
      %v1888 = vld [vmem:[%s3] sm:$0xff]
      %1890 = vset.pattern.permute.xlu0 0
      %1891 = vperm.xlu0 %1890, %v1888
      %v1892 = vpop.permute.xlu0 %1891
      %vm1894 = vcmask 588800
      %v1896 = vsel %vm1894, %v1887, 0
      %1898 = vmatprep.subr.mxu0 %v1562
      %1899 = vmatpush1.msra.mxu0 %v1548
      %1900 = vmatprep.subr.mxu0 %v1608
      %1901 = vmatpush1.msra.mxu0 %v1594
      %1902 = vmatprep.subr.mxu0 %v1654
      %1903 = vmatpush1.msra.mxu0 %v1640
      %1904 = vmatprep.subr.mxu0 %v1700
      %1905 = vmatpush1.msra.mxu0 %v1686
      %1906 = vmatprep.subr.mxu0 %v1086
      %1907 = vmatpush1.msra.mxu0 %v1085
      %1908 = vmatprep.subr.mxu0 %v1746
      %1909 = vmatpush1.msra.mxu0 %v1732
      %1910 = vmatprep.subr.mxu0 %v1792
      %1911 = vmatpush1.msra.mxu0 %v1778
      %1912 = vmatprep.subr.mxu0 %v1838
      %1913 = vmatpush1.msra.mxu0 %v1824
      %1914 = vmatprep.subr.mxu0 %v1884
      %1915 = vmatpush1.msra.mxu0 %v1870
      %1916 = vmatprep.subr.mxu0 0.0
      %1917 = vmatpush1.msra.mxu0 0.0
      %1918 = vmatprep.subr.mxu0 0.0
      %1919 = vmatpush1.msra.mxu0 0.0
      %1920 = vmatprep.subr.mxu0 0.0
      %1921 = vmatpush1.msra.mxu0 0.0
      %1922 = vmatprep.subr.mxu0 0.0
      %1923 = vmatpush1.msra.mxu0 0.0
      %1924 = vmatprep.subr.mxu0 0.0
      %1925 = vmatpush1.msra.mxu0 0.0
      %1926 = vmatprep.subr.mxu0 0.0
      %1927 = vmatpush1.msra.mxu0 0.0
      %1928 = vmatprep.subr.mxu0 0.0
      %1929 = vmatpush1.msra.mxu0 0.0
      %1930 = vmatprep.subr.mxu0 0.0
      %1931 = vmatpush1.msra.mxu0 0.0
      %1932 = vmatprep.subr.mxu0 0.0
      %1933 = vmatpush1.msra.mxu0 0.0
      %1934 = vmatprep.subr.mxu0 0.0
      %1935 = vmatpush1.msra.mxu0 0.0
      %1936 = vmatprep.subr.mxu0 0.0
      %1937 = vmatpush1.msra.mxu0 0.0
      %1938 = vmatprep.subr.mxu0 0.0
      %1939 = vmatpush1.msra.mxu0 0.0
      %1940 = vmatprep.subr.mxu0 0.0
      %1941 = vmatpush1.msra.mxu0 0.0
      %1942 = vmatprep.subr.mxu0 0.0
      %1943 = vmatpush1.msra.mxu0 0.0
      %1944 = vmatprep.subr.mxu0 0.0
      %1945 = vmatpush1.msra.mxu0 0.0
      %1946 = vmatprep.subr.mxu0 0.0
      %1947 = vmatpush1.msra.mxu0 0.0
      %1948 = vmatprep.subr.mxu0 0.0
      %1949 = vmatpush1.msra.mxu0 0.0
      %1950 = vmatprep.subr.mxu0 0.0
      %1951 = vmatpush1.msra.mxu0 0.0
      %1952 = vmatprep.subr.mxu0 0.0
      %1953 = vmatpush1.msra.mxu0 0.0
      %1954 = vmatprep.subr.mxu0 0.0
      %1955 = vmatpush1.msra.mxu0 0.0
      %1956 = vmatprep.subr.mxu0 0.0
      %1957 = vmatpush1.msra.mxu0 0.0
      %1958 = vmatprep.subr.mxu0 0.0
      %1959 = vmatpush1.msra.mxu0 0.0
      %1960 = vmatprep.subr.mxu0 0.0
      %1961 = vmatpush1.msra.mxu0 0.0
      %1962 = vmatprep.mubr.f32.mxu0 0.0
      %1963 = vmatmul.mubr.f32.gmra.mrb[0].mxu0 %v1896
      %v1964 = vpop.f32.mrb[0].mxu0
      %v1965 = vadd.f32 %v1892, %v1964
      %v1966 = vpop.f32.mrb[0].mxu0
      %v1967 = vadd.f32 %v1892, %v1966
      %1968 = vdwg.mxu0
      %v1969 = vmax.f32 %v1965, 0.0
      %v1970 = vmax.f32 %v1967, 0.0
      %1971 = vrot.lane.b32.xlu0 %v1969, 17
      %v1972 = vpop.permute.xlu0 %1971
      %1973 = vrot.lane.b32.xlu0 %v1970, 17
      %v1974 = vpop.permute.xlu0 %1973
      %v1975 = vsel %vm378, %v1972, %v1974
      %v1976 = vsel %vm378, %v1974, %v1972
      %v1979 = vrot.slane %v1976, 1
      %v1980 = vrot.slane %v1975, 1
      %v1981 = vrot.slane %v1976, 2
      %v1982 = vrot.slane %v1975, 2
      %v1983 = vrot.slane %v1976, 3
      %v1984 = vrot.slane %v1975, 3
      %v1985 = vrot.slane %v1976, 4
      %v1986 = vrot.slane %v1975, 4
      %v1987 = vrot.slane %v1976, 5
      %v1988 = vrot.slane %v1975, 5
      %v1989 = vrot.slane %v1976, 6
      %v1990 = vrot.slane %v1975, 6
      %v1991 = vrot.slane %v1976, 7
      %v1992 = vrot.slane %v1975, 7
      %v2009 = vsel %vm383, %v1976, 0.0
      %v2010 = vsel %vm384, %v1975, 0.0
      %v2011 = vsel %vm383, %v1979, 0.0
      %v2012 = vsel %vm384, %v1980, 0.0
      %v2013 = vsel %vm383, %v1981, 0.0
      %v2014 = vsel %vm384, %v1982, 0.0
      %v2015 = vsel %vm383, %v1983, 0.0
      %v2016 = vsel %vm384, %v1984, 0.0
      %v2017 = vsel %vm383, %v1985, 0.0
      %v2018 = vsel %vm384, %v1986, 0.0
      %v2019 = vsel %vm383, %v1987, 0.0
      %v2020 = vsel %vm384, %v1988, 0.0
      %v2021 = vsel %vm383, %v1989, 0.0
      %v2022 = vsel %vm384, %v1990, 0.0
      %v2023 = vsel %vm383, %v1991, 0.0
      %v2024 = vsel %vm384, %v1992, 0.0
      %2025 = vrot.lane.b32.xlu0 %v1969, 16
      %v2026 = vpop.permute.xlu0 %2025
      %2027 = vrot.lane.b32.xlu0 %v1970, 16
      %v2028 = vpop.permute.xlu0 %2027
      %v2029 = vsel %vm474, %v2026, %v2028
      %v2030 = vsel %vm474, %v2028, %v2026
      %v2033 = vrot.slane %v2030, 7
      %v2034 = vrot.slane %v2029, 7
      %v2035 = vrot.slane %v2030, 1
      %v2036 = vrot.slane %v2029, 1
      %v2037 = vrot.slane %v2030, 2
      %v2038 = vrot.slane %v2029, 2
      %v2039 = vrot.slane %v2030, 3
      %v2040 = vrot.slane %v2029, 3
      %v2041 = vrot.slane %v2030, 4
      %v2042 = vrot.slane %v2029, 4
      %v2043 = vrot.slane %v2030, 5
      %v2044 = vrot.slane %v2029, 5
      %v2045 = vrot.slane %v2030, 6
      %v2046 = vrot.slane %v2029, 6
      %v2063 = vsel %vm383, %v2033, 0.0
      %v2064 = vsel %vm384, %v2034, 0.0
      %v2065 = vsel %vm383, %v2030, 0.0
      %v2066 = vsel %vm384, %v2029, 0.0
      %v2067 = vsel %vm383, %v2035, 0.0
      %v2068 = vsel %vm384, %v2036, 0.0
      %v2069 = vsel %vm383, %v2037, 0.0
      %v2070 = vsel %vm384, %v2038, 0.0
      %v2071 = vsel %vm383, %v2039, 0.0
      %v2072 = vsel %vm384, %v2040, 0.0
      %v2073 = vsel %vm383, %v2041, 0.0
      %v2074 = vsel %vm384, %v2042, 0.0
      %v2075 = vsel %vm383, %v2043, 0.0
      %v2076 = vsel %vm384, %v2044, 0.0
      %v2077 = vsel %vm383, %v2045, 0.0
      %v2078 = vsel %vm384, %v2046, 0.0
      %2079 = vrot.lane.b32.xlu0 %v1969, 15
      %v2080 = vpop.permute.xlu0 %2079
      %2081 = vrot.lane.b32.xlu0 %v1970, 15
      %v2082 = vpop.permute.xlu0 %2081
      %v2083 = vsel %vm559, %v2080, %v2082
      %v2084 = vsel %vm559, %v2082, %v2080
      %v2087 = vrot.slane %v2084, 6
      %v2088 = vrot.slane %v2083, 6
      %v2089 = vrot.slane %v2084, 7
      %v2090 = vrot.slane %v2083, 7
      %v2091 = vrot.slane %v2084, 1
      %v2092 = vrot.slane %v2083, 1
      %v2093 = vrot.slane %v2084, 2
      %v2094 = vrot.slane %v2083, 2
      %v2095 = vrot.slane %v2084, 3
      %v2096 = vrot.slane %v2083, 3
      %v2097 = vrot.slane %v2084, 4
      %v2098 = vrot.slane %v2083, 4
      %v2099 = vrot.slane %v2084, 5
      %v2100 = vrot.slane %v2083, 5
      %v2117 = vsel %vm383, %v2087, 0.0
      %v2118 = vsel %vm384, %v2088, 0.0
      %v2119 = vsel %vm383, %v2089, 0.0
      %v2120 = vsel %vm384, %v2090, 0.0
      %v2121 = vsel %vm383, %v2084, 0.0
      %v2122 = vsel %vm384, %v2083, 0.0
      %v2123 = vsel %vm383, %v2091, 0.0
      %v2124 = vsel %vm384, %v2092, 0.0
      %v2125 = vsel %vm383, %v2093, 0.0
      %v2126 = vsel %vm384, %v2094, 0.0
      %v2127 = vsel %vm383, %v2095, 0.0
      %v2128 = vsel %vm384, %v2096, 0.0
      %v2129 = vsel %vm383, %v2097, 0.0
      %v2130 = vsel %vm384, %v2098, 0.0
      %v2131 = vsel %vm383, %v2099, 0.0
      %v2132 = vsel %vm384, %v2100, 0.0
      %2133 = vrot.lane.b32.xlu0 %v1969, 1
      %v2134 = vpop.permute.xlu0 %2133
      %2135 = vrot.lane.b32.xlu0 %v1970, 1
      %v2136 = vpop.permute.xlu0 %2135
      %v2137 = vsel %vm644, %v2134, %v2136
      %v2138 = vsel %vm644, %v2136, %v2134
      %v2141 = vrot.slane %v2138, 5
      %v2142 = vrot.slane %v2137, 5
      %v2143 = vrot.slane %v2138, 6
      %v2144 = vrot.slane %v2137, 6
      %v2145 = vrot.slane %v2138, 7
      %v2146 = vrot.slane %v2137, 7
      %v2147 = vrot.slane %v2138, 1
      %v2148 = vrot.slane %v2137, 1
      %v2149 = vrot.slane %v2138, 2
      %v2150 = vrot.slane %v2137, 2
      %v2151 = vrot.slane %v2138, 3
      %v2152 = vrot.slane %v2137, 3
      %v2153 = vrot.slane %v2138, 4
      %v2154 = vrot.slane %v2137, 4
      %v2171 = vsel %vm383, %v2141, 0.0
      %v2172 = vsel %vm384, %v2142, 0.0
      %v2173 = vsel %vm383, %v2143, 0.0
      %v2174 = vsel %vm384, %v2144, 0.0
      %v2175 = vsel %vm383, %v2145, 0.0
      %v2176 = vsel %vm384, %v2146, 0.0
      %v2177 = vsel %vm383, %v2138, 0.0
      %v2178 = vsel %vm384, %v2137, 0.0
      %v2179 = vsel %vm383, %v2147, 0.0
      %v2180 = vsel %vm384, %v2148, 0.0
      %v2181 = vsel %vm383, %v2149, 0.0
      %v2182 = vsel %vm384, %v2150, 0.0
      %v2183 = vsel %vm383, %v2151, 0.0
      %v2184 = vsel %vm384, %v2152, 0.0
      %v2185 = vsel %vm383, %v2153, 0.0
      %v2186 = vsel %vm384, %v2154, 0.0
      %2187 = vrot.lane.b32.xlu0 %v1969, 127
      %v2188 = vpop.permute.xlu0 %2187
      %2189 = vrot.lane.b32.xlu0 %v1970, 127
      %v2190 = vpop.permute.xlu0 %2189
      %v2191 = vsel %vm729, %v2188, %v2190
      %v2192 = vsel %vm729, %v2190, %v2188
      %v2195 = vrot.slane %v2191, 3
      %v2196 = vrot.slane %v2192, 3
      %v2197 = vrot.slane %v2191, 4
      %v2198 = vrot.slane %v2192, 4
      %v2199 = vrot.slane %v2191, 5
      %v2200 = vrot.slane %v2192, 5
      %v2201 = vrot.slane %v2191, 6
      %v2202 = vrot.slane %v2192, 6
      %v2203 = vrot.slane %v2191, 7
      %v2204 = vrot.slane %v2192, 7
      %v2205 = vrot.slane %v2191, 1
      %v2206 = vrot.slane %v2192, 1
      %v2207 = vrot.slane %v2191, 2
      %v2208 = vrot.slane %v2192, 2
      %v2225 = vsel %vm383, %v2195, 0.0
      %v2226 = vsel %vm384, %v2196, 0.0
      %v2227 = vsel %vm383, %v2197, 0.0
      %v2228 = vsel %vm384, %v2198, 0.0
      %v2229 = vsel %vm383, %v2199, 0.0
      %v2230 = vsel %vm384, %v2200, 0.0
      %v2231 = vsel %vm383, %v2201, 0.0
      %v2232 = vsel %vm384, %v2202, 0.0
      %v2233 = vsel %vm383, %v2203, 0.0
      %v2234 = vsel %vm384, %v2204, 0.0
      %v2235 = vsel %vm383, %v2191, 0.0
      %v2236 = vsel %vm384, %v2192, 0.0
      %v2237 = vsel %vm383, %v2205, 0.0
      %v2238 = vsel %vm384, %v2206, 0.0
      %v2239 = vsel %vm383, %v2207, 0.0
      %v2240 = vsel %vm384, %v2208, 0.0
      %2241 = vrot.lane.b32.xlu0 %v1969, 113
      %v2242 = vpop.permute.xlu0 %2241
      %2243 = vrot.lane.b32.xlu0 %v1970, 113
      %v2244 = vpop.permute.xlu0 %2243
      %v2245 = vsel %vm816, %v2242, %v2244
      %v2246 = vsel %vm816, %v2244, %v2242
      %v2249 = vrot.slane %v2245, 2
      %v2250 = vrot.slane %v2246, 2
      %v2251 = vrot.slane %v2245, 3
      %v2252 = vrot.slane %v2246, 3
      %v2253 = vrot.slane %v2245, 4
      %v2254 = vrot.slane %v2246, 4
      %v2255 = vrot.slane %v2245, 5
      %v2256 = vrot.slane %v2246, 5
      %v2257 = vrot.slane %v2245, 6
      %v2258 = vrot.slane %v2246, 6
      %v2259 = vrot.slane %v2245, 7
      %v2260 = vrot.slane %v2246, 7
      %v2261 = vrot.slane %v2245, 1
      %v2262 = vrot.slane %v2246, 1
      %v2279 = vsel %vm383, %v2249, 0.0
      %v2280 = vsel %vm384, %v2250, 0.0
      %v2281 = vsel %vm383, %v2251, 0.0
      %v2282 = vsel %vm384, %v2252, 0.0
      %v2283 = vsel %vm383, %v2253, 0.0
      %v2284 = vsel %vm384, %v2254, 0.0
      %v2285 = vsel %vm383, %v2255, 0.0
      %v2286 = vsel %vm384, %v2256, 0.0
      %v2287 = vsel %vm383, %v2257, 0.0
      %v2288 = vsel %vm384, %v2258, 0.0
      %v2289 = vsel %vm383, %v2259, 0.0
      %v2290 = vsel %vm384, %v2260, 0.0
      %v2291 = vsel %vm383, %v2245, 0.0
      %v2292 = vsel %vm384, %v2246, 0.0
      %v2293 = vsel %vm383, %v2261, 0.0
      %v2294 = vsel %vm384, %v2262, 0.0
      %2295 = vrot.lane.b32.xlu0 %v1969, 112
      %v2296 = vpop.permute.xlu0 %2295
      %2297 = vrot.lane.b32.xlu0 %v1970, 112
      %v2298 = vpop.permute.xlu0 %2297
      %v2299 = vsel %vm903, %v2296, %v2298
      %v2300 = vsel %vm903, %v2298, %v2296
      %v2303 = vrot.slane %v2299, 1
      %v2304 = vrot.slane %v2300, 1
      %v2305 = vrot.slane %v2299, 2
      %v2306 = vrot.slane %v2300, 2
      %v2307 = vrot.slane %v2299, 3
      %v2308 = vrot.slane %v2300, 3
      %v2309 = vrot.slane %v2299, 4
      %v2310 = vrot.slane %v2300, 4
      %v2311 = vrot.slane %v2299, 5
      %v2312 = vrot.slane %v2300, 5
      %v2313 = vrot.slane %v2299, 6
      %v2314 = vrot.slane %v2300, 6
      %v2315 = vrot.slane %v2299, 7
      %v2316 = vrot.slane %v2300, 7
      %v2333 = vsel %vm383, %v2303, 0.0
      %v2334 = vsel %vm384, %v2304, 0.0
      %v2335 = vsel %vm383, %v2305, 0.0
      %v2336 = vsel %vm384, %v2306, 0.0
      %v2337 = vsel %vm383, %v2307, 0.0
      %v2338 = vsel %vm384, %v2308, 0.0
      %v2339 = vsel %vm383, %v2309, 0.0
      %v2340 = vsel %vm384, %v2310, 0.0
      %v2341 = vsel %vm383, %v2311, 0.0
      %v2342 = vsel %vm384, %v2312, 0.0
      %v2343 = vsel %vm383, %v2313, 0.0
      %v2344 = vsel %vm384, %v2314, 0.0
      %v2345 = vsel %vm383, %v2315, 0.0
      %v2346 = vsel %vm384, %v2316, 0.0
      %v2347 = vsel %vm383, %v2299, 0.0
      %v2348 = vsel %vm384, %v2300, 0.0
      %2349 = vrot.lane.b32.xlu0 %v1969, 111
      %v2350 = vpop.permute.xlu0 %2349
      %2351 = vrot.lane.b32.xlu0 %v1970, 111
      %v2352 = vpop.permute.xlu0 %2351
      %v2353 = vsel %vm990, %v2350, %v2352
      %v2354 = vsel %vm990, %v2352, %v2350
      %v2357 = vrot.slane %v2353, 1
      %v2358 = vrot.slane %v2354, 1
      %v2359 = vrot.slane %v2353, 2
      %v2360 = vrot.slane %v2354, 2
      %v2361 = vrot.slane %v2353, 3
      %v2362 = vrot.slane %v2354, 3
      %v2363 = vrot.slane %v2353, 4
      %v2364 = vrot.slane %v2354, 4
      %v2365 = vrot.slane %v2353, 5
      %v2366 = vrot.slane %v2354, 5
      %v2367 = vrot.slane %v2353, 6
      %v2368 = vrot.slane %v2354, 6
      %v2369 = vrot.slane %v2353, 7
      %v2370 = vrot.slane %v2354, 7
      %v2387 = vsel %vm995, %v2353, 0.0
      %v2388 = vsel %vm996, %v2354, 0.0
      %v2389 = vsel %vm995, %v2357, 0.0
      %v2390 = vsel %vm996, %v2358, 0.0
      %v2391 = vsel %vm995, %v2359, 0.0
      %v2392 = vsel %vm996, %v2360, 0.0
      %v2393 = vsel %vm995, %v2361, 0.0
      %v2394 = vsel %vm996, %v2362, 0.0
      %v2395 = vsel %vm995, %v2363, 0.0
      %v2396 = vsel %vm996, %v2364, 0.0
      %v2397 = vsel %vm995, %v2365, 0.0
      %v2398 = vsel %vm996, %v2366, 0.0
      %v2399 = vsel %vm995, %v2367, 0.0
      %v2400 = vsel %vm996, %v2368, 0.0
      %v2401 = vsel %vm995, %v2369, 0.0
      %v2402 = vsel %vm996, %v2370, 0.0
      %v2419 = vrot.slane %v2011, 7
      %v2420 = vsel %vm423, %v2419, %v2009
      %v2421 = vrot.slane %v2013, 6
      %v2422 = vsel %vm428, %v2421, %v2420
      %v2423 = vrot.slane %v2015, 5
      %v2424 = vsel %vm433, %v2423, %v2422
      %v2425 = vrot.slane %v2017, 4
      %v2426 = vsel %vm421, %v2425, %v2424
      %v2427 = vrot.slane %v2019, 3
      %v2428 = vsel %vm425, %v2427, %v2426
      %v2429 = vrot.slane %v2021, 2
      %v2430 = vsel %vm430, %v2429, %v2428
      %v2431 = vrot.slane %v2023, 1
      %v2432 = vsel %vm435, %v2431, %v2430
      %v2433 = vrot.slane %v2012, 7
      %v2434 = vsel %vm423, %v2433, %v2010
      %v2435 = vrot.slane %v2014, 6
      %v2436 = vsel %vm428, %v2435, %v2434
      %v2437 = vrot.slane %v2016, 5
      %v2438 = vsel %vm433, %v2437, %v2436
      %v2439 = vrot.slane %v2018, 4
      %v2440 = vsel %vm421, %v2439, %v2438
      %v2441 = vrot.slane %v2020, 3
      %v2442 = vsel %vm425, %v2441, %v2440
      %v2443 = vrot.slane %v2022, 2
      %v2444 = vsel %vm430, %v2443, %v2442
      %v2445 = vrot.slane %v2024, 1
      %v2446 = vsel %vm435, %v2445, %v2444
      %v2465 = vrot.slane %v2063, 1
      %v2466 = vsel %vm423, %v2065, %v2465
      %v2467 = vrot.slane %v2067, 7
      %v2468 = vsel %vm428, %v2467, %v2466
      %v2469 = vrot.slane %v2069, 6
      %v2470 = vsel %vm433, %v2469, %v2468
      %v2471 = vrot.slane %v2071, 5
      %v2472 = vsel %vm421, %v2471, %v2470
      %v2473 = vrot.slane %v2073, 4
      %v2474 = vsel %vm425, %v2473, %v2472
      %v2475 = vrot.slane %v2075, 3
      %v2476 = vsel %vm430, %v2475, %v2474
      %v2477 = vrot.slane %v2077, 2
      %v2478 = vsel %vm435, %v2477, %v2476
      %v2479 = vrot.slane %v2064, 1
      %v2480 = vsel %vm423, %v2066, %v2479
      %v2481 = vrot.slane %v2068, 7
      %v2482 = vsel %vm428, %v2481, %v2480
      %v2483 = vrot.slane %v2070, 6
      %v2484 = vsel %vm433, %v2483, %v2482
      %v2485 = vrot.slane %v2072, 5
      %v2486 = vsel %vm421, %v2485, %v2484
      %v2487 = vrot.slane %v2074, 4
      %v2488 = vsel %vm425, %v2487, %v2486
      %v2489 = vrot.slane %v2076, 3
      %v2490 = vsel %vm430, %v2489, %v2488
      %v2491 = vrot.slane %v2078, 2
      %v2492 = vsel %vm435, %v2491, %v2490
      %v2511 = vrot.slane %v2117, 2
      %v2512 = vrot.slane %v2119, 1
      %v2513 = vsel %vm423, %v2512, %v2511
      %v2514 = vsel %vm428, %v2121, %v2513
      %v2515 = vrot.slane %v2123, 7
      %v2516 = vsel %vm433, %v2515, %v2514
      %v2517 = vrot.slane %v2125, 6
      %v2518 = vsel %vm421, %v2517, %v2516
      %v2519 = vrot.slane %v2127, 5
      %v2520 = vsel %vm425, %v2519, %v2518
      %v2521 = vrot.slane %v2129, 4
      %v2522 = vsel %vm430, %v2521, %v2520
      %v2523 = vrot.slane %v2131, 3
      %v2524 = vsel %vm435, %v2523, %v2522
      %v2525 = vrot.slane %v2118, 2
      %v2526 = vrot.slane %v2120, 1
      %v2527 = vsel %vm423, %v2526, %v2525
      %v2528 = vsel %vm428, %v2122, %v2527
      %v2529 = vrot.slane %v2124, 7
      %v2530 = vsel %vm433, %v2529, %v2528
      %v2531 = vrot.slane %v2126, 6
      %v2532 = vsel %vm421, %v2531, %v2530
      %v2533 = vrot.slane %v2128, 5
      %v2534 = vsel %vm425, %v2533, %v2532
      %v2535 = vrot.slane %v2130, 4
      %v2536 = vsel %vm430, %v2535, %v2534
      %v2537 = vrot.slane %v2132, 3
      %v2538 = vsel %vm435, %v2537, %v2536
      %v2557 = vrot.slane %v2171, 3
      %v2558 = vrot.slane %v2173, 2
      %v2559 = vsel %vm423, %v2558, %v2557
      %v2560 = vrot.slane %v2175, 1
      %v2561 = vsel %vm428, %v2560, %v2559
      %v2562 = vsel %vm433, %v2177, %v2561
      %v2563 = vrot.slane %v2179, 7
      %v2564 = vsel %vm421, %v2563, %v2562
      %v2565 = vrot.slane %v2181, 6
      %v2566 = vsel %vm425, %v2565, %v2564
      %v2567 = vrot.slane %v2183, 5
      %v2568 = vsel %vm430, %v2567, %v2566
      %v2569 = vrot.slane %v2185, 4
      %v2570 = vsel %vm435, %v2569, %v2568
      %v2571 = vrot.slane %v2172, 3
      %v2572 = vrot.slane %v2174, 2
      %v2573 = vsel %vm423, %v2572, %v2571
      %v2574 = vrot.slane %v2176, 1
      %v2575 = vsel %vm428, %v2574, %v2573
      %v2576 = vsel %vm433, %v2178, %v2575
      %v2577 = vrot.slane %v2180, 7
      %v2578 = vsel %vm421, %v2577, %v2576
      %v2579 = vrot.slane %v2182, 6
      %v2580 = vsel %vm425, %v2579, %v2578
      %v2581 = vrot.slane %v2184, 5
      %v2582 = vsel %vm430, %v2581, %v2580
      %v2583 = vrot.slane %v2186, 4
      %v2584 = vsel %vm435, %v2583, %v2582
      %v2603 = vrot.slane %v2225, 5
      %v2604 = vrot.slane %v2227, 4
      %v2605 = vsel %vm423, %v2604, %v2603
      %v2606 = vrot.slane %v2229, 3
      %v2607 = vsel %vm428, %v2606, %v2605
      %v2608 = vrot.slane %v2231, 2
      %v2609 = vsel %vm433, %v2608, %v2607
      %v2610 = vrot.slane %v2233, 1
      %v2611 = vsel %vm421, %v2610, %v2609
      %v2612 = vsel %vm425, %v2235, %v2611
      %v2613 = vrot.slane %v2237, 7
      %v2614 = vsel %vm430, %v2613, %v2612
      %v2615 = vrot.slane %v2239, 6
      %v2616 = vsel %vm435, %v2615, %v2614
      %v2617 = vrot.slane %v2226, 5
      %v2618 = vrot.slane %v2228, 4
      %v2619 = vsel %vm423, %v2618, %v2617
      %v2620 = vrot.slane %v2230, 3
      %v2621 = vsel %vm428, %v2620, %v2619
      %v2622 = vrot.slane %v2232, 2
      %v2623 = vsel %vm433, %v2622, %v2621
      %v2624 = vrot.slane %v2234, 1
      %v2625 = vsel %vm421, %v2624, %v2623
      %v2626 = vsel %vm425, %v2236, %v2625
      %v2627 = vrot.slane %v2238, 7
      %v2628 = vsel %vm430, %v2627, %v2626
      %v2629 = vrot.slane %v2240, 6
      %v2630 = vsel %vm435, %v2629, %v2628
      %v2649 = vrot.slane %v2279, 6
      %v2650 = vrot.slane %v2281, 5
      %v2651 = vsel %vm423, %v2650, %v2649
      %v2652 = vrot.slane %v2283, 4
      %v2653 = vsel %vm428, %v2652, %v2651
      %v2654 = vrot.slane %v2285, 3
      %v2655 = vsel %vm433, %v2654, %v2653
      %v2656 = vrot.slane %v2287, 2
      %v2657 = vsel %vm421, %v2656, %v2655
      %v2658 = vrot.slane %v2289, 1
      %v2659 = vsel %vm425, %v2658, %v2657
      %v2660 = vsel %vm430, %v2291, %v2659
      %v2661 = vrot.slane %v2293, 7
      %v2662 = vsel %vm435, %v2661, %v2660
      %v2663 = vrot.slane %v2280, 6
      %v2664 = vrot.slane %v2282, 5
      %v2665 = vsel %vm423, %v2664, %v2663
      %v2666 = vrot.slane %v2284, 4
      %v2667 = vsel %vm428, %v2666, %v2665
      %v2668 = vrot.slane %v2286, 3
      %v2669 = vsel %vm433, %v2668, %v2667
      %v2670 = vrot.slane %v2288, 2
      %v2671 = vsel %vm421, %v2670, %v2669
      %v2672 = vrot.slane %v2290, 1
      %v2673 = vsel %vm425, %v2672, %v2671
      %v2674 = vsel %vm430, %v2292, %v2673
      %v2675 = vrot.slane %v2294, 7
      %v2676 = vsel %vm435, %v2675, %v2674
      %v2695 = vrot.slane %v2333, 7
      %v2696 = vrot.slane %v2335, 6
      %v2697 = vsel %vm423, %v2696, %v2695
      %v2698 = vrot.slane %v2337, 5
      %v2699 = vsel %vm428, %v2698, %v2697
      %v2700 = vrot.slane %v2339, 4
      %v2701 = vsel %vm433, %v2700, %v2699
      %v2702 = vrot.slane %v2341, 3
      %v2703 = vsel %vm421, %v2702, %v2701
      %v2704 = vrot.slane %v2343, 2
      %v2705 = vsel %vm425, %v2704, %v2703
      %v2706 = vrot.slane %v2345, 1
      %v2707 = vsel %vm430, %v2706, %v2705
      %v2708 = vsel %vm435, %v2347, %v2707
      %v2709 = vrot.slane %v2334, 7
      %v2710 = vrot.slane %v2336, 6
      %v2711 = vsel %vm423, %v2710, %v2709
      %v2712 = vrot.slane %v2338, 5
      %v2713 = vsel %vm428, %v2712, %v2711
      %v2714 = vrot.slane %v2340, 4
      %v2715 = vsel %vm433, %v2714, %v2713
      %v2716 = vrot.slane %v2342, 3
      %v2717 = vsel %vm421, %v2716, %v2715
      %v2718 = vrot.slane %v2344, 2
      %v2719 = vsel %vm425, %v2718, %v2717
      %v2720 = vrot.slane %v2346, 1
      %v2721 = vsel %vm430, %v2720, %v2719
      %v2722 = vsel %vm435, %v2348, %v2721
      %v2741 = vrot.slane %v2389, 7
      %v2742 = vsel %vm423, %v2741, %v2387
      %v2743 = vrot.slane %v2391, 6
      %v2744 = vsel %vm428, %v2743, %v2742
      %v2745 = vrot.slane %v2393, 5
      %v2746 = vsel %vm433, %v2745, %v2744
      %v2747 = vrot.slane %v2395, 4
      %v2748 = vsel %vm421, %v2747, %v2746
      %v2749 = vrot.slane %v2397, 3
      %v2750 = vsel %vm425, %v2749, %v2748
      %v2751 = vrot.slane %v2399, 2
      %v2752 = vsel %vm430, %v2751, %v2750
      %v2753 = vrot.slane %v2401, 1
      %v2754 = vsel %vm435, %v2753, %v2752
      %v2755 = vrot.slane %v2390, 7
      %v2756 = vsel %vm423, %v2755, %v2388
      %v2757 = vrot.slane %v2392, 6
      %v2758 = vsel %vm428, %v2757, %v2756
      %v2759 = vrot.slane %v2394, 5
      %v2760 = vsel %vm433, %v2759, %v2758
      %v2761 = vrot.slane %v2396, 4
      %v2762 = vsel %vm421, %v2761, %v2760
      %v2763 = vrot.slane %v2398, 3
      %v2764 = vsel %vm425, %v2763, %v2762
      %v2765 = vrot.slane %v2400, 2
      %v2766 = vsel %vm430, %v2765, %v2764
      %v2767 = vrot.slane %v2402, 1
      %v2768 = vsel %vm435, %v2767, %v2766
      %v2771 = vld [vmem:[%s4] sm:$0xff]
      %v2772 = vld [vmem:[%s5] sm:$0xff]
      %2774 = vset.pattern.permute.xlu0 0
      %2775 = vperm.xlu0 %2774, %v2772
      %v2776 = vpop.permute.xlu0 %2775
      %v2779 = vsel %vm1894, %v2771, 0
      %2781 = vmatprep.subr.mxu0 %v2446
      %2782 = vmatpush1.msra.mxu0 %v2432
      %2783 = vmatprep.subr.mxu0 %v2492
      %2784 = vmatpush1.msra.mxu0 %v2478
      %2785 = vmatprep.subr.mxu0 %v2538
      %2786 = vmatpush1.msra.mxu0 %v2524
      %2787 = vmatprep.subr.mxu0 %v2584
      %2788 = vmatpush1.msra.mxu0 %v2570
      %2789 = vmatprep.subr.mxu0 %v1970
      %2790 = vmatpush1.msra.mxu0 %v1969
      %2791 = vmatprep.subr.mxu0 %v2630
      %2792 = vmatpush1.msra.mxu0 %v2616
      %2793 = vmatprep.subr.mxu0 %v2676
      %2794 = vmatpush1.msra.mxu0 %v2662
      %2795 = vmatprep.subr.mxu0 %v2722
      %2796 = vmatpush1.msra.mxu0 %v2708
      %2797 = vmatprep.subr.mxu0 %v2768
      %2798 = vmatpush1.msra.mxu0 %v2754
      %2799 = vmatprep.subr.mxu0 0.0
      %2800 = vmatpush1.msra.mxu0 0.0
      %2801 = vmatprep.subr.mxu0 0.0
      %2802 = vmatpush1.msra.mxu0 0.0
      %2803 = vmatprep.subr.mxu0 0.0
      %2804 = vmatpush1.msra.mxu0 0.0
      %2805 = vmatprep.subr.mxu0 0.0
      %2806 = vmatpush1.msra.mxu0 0.0
      %2807 = vmatprep.subr.mxu0 0.0
      %2808 = vmatpush1.msra.mxu0 0.0
      %2809 = vmatprep.subr.mxu0 0.0
      %2810 = vmatpush1.msra.mxu0 0.0
      %2811 = vmatprep.subr.mxu0 0.0
      %2812 = vmatpush1.msra.mxu0 0.0
      %2813 = vmatprep.subr.mxu0 0.0
      %2814 = vmatpush1.msra.mxu0 0.0
      %2815 = vmatprep.subr.mxu0 0.0
      %2816 = vmatpush1.msra.mxu0 0.0
      %2817 = vmatprep.subr.mxu0 0.0
      %2818 = vmatpush1.msra.mxu0 0.0
      %2819 = vmatprep.subr.mxu0 0.0
      %2820 = vmatpush1.msra.mxu0 0.0
      %2821 = vmatprep.subr.mxu0 0.0
      %2822 = vmatpush1.msra.mxu0 0.0
      %2823 = vmatprep.subr.mxu0 0.0
      %2824 = vmatpush1.msra.mxu0 0.0
      %2825 = vmatprep.subr.mxu0 0.0
      %2826 = vmatpush1.msra.mxu0 0.0
      %2827 = vmatprep.subr.mxu0 0.0
      %2828 = vmatpush1.msra.mxu0 0.0
      %2829 = vmatprep.subr.mxu0 0.0
      %2830 = vmatpush1.msra.mxu0 0.0
      %2831 = vmatprep.subr.mxu0 0.0
      %2832 = vmatpush1.msra.mxu0 0.0
      %2833 = vmatprep.subr.mxu0 0.0
      %2834 = vmatpush1.msra.mxu0 0.0
      %2835 = vmatprep.subr.mxu0 0.0
      %2836 = vmatpush1.msra.mxu0 0.0
      %2837 = vmatprep.subr.mxu0 0.0
      %2838 = vmatpush1.msra.mxu0 0.0
      %2839 = vmatprep.subr.mxu0 0.0
      %2840 = vmatpush1.msra.mxu0 0.0
      %2841 = vmatprep.subr.mxu0 0.0
      %2842 = vmatpush1.msra.mxu0 0.0
      %2843 = vmatprep.subr.mxu0 0.0
      %2844 = vmatpush1.msra.mxu0 0.0
      %2845 = vmatprep.mubr.f32.mxu0 0.0
      %2846 = vmatmul.mubr.f32.gmra.mrb[0].mxu0 %v2779
      %v2847 = vpop.f32.mrb[0].mxu0
      %v2848 = vadd.f32 %v2776, %v2847
      %v2849 = vpop.f32.mrb[0].mxu0
      %v2850 = vadd.f32 %v2776, %v2849
      %2851 = vdwg.mxu0
      %v2852 = vmax.f32 %v2848, 0.0
      %v2853 = vmax.f32 %v2850, 0.0
      %v2854 = vld [vmem:[%s6] sm:$0xff]
      %v2855 = vld [vmem:[%s6 + $0x8] sm:$0xff]
      %v2856 = vld [vmem:[%s7] sm:$0xff]
      %v2857 = vld [vmem:[%s7 + $0x8] sm:$0xff]
      %2859 = vset.pattern.permute.xlu0 0
      %2860 = vperm.xlu0 %2859, %v2856
      %v2861 = vpop.permute.xlu0 %2860
      %2864 = vset.pattern.permute.xlu0 0
      %2865 = vperm.xlu0 %2864, %v2857
      %v2866 = vpop.permute.xlu0 %2865
      %vm2868 = vcmask 64512
      %v2870 = vsel %vm2868, %v2854, 0
      %v2873 = vsel %vm2868, %v2855, 0
      %2875 = vmatprep.subr.mxu0 %v2853
      %2876 = vmatpush1.msra.mxu0 %v2852
      %2877 = vmatprep.subr.mxu0 0.0
      %2878 = vmatpush1.msra.mxu0 0.0
      %2879 = vmatprep.subr.mxu0 0.0
      %2880 = vmatpush1.msra.mxu0 0.0
      %2881 = vmatprep.subr.mxu0 0.0
      %2882 = vmatpush1.msra.mxu0 0.0
      %2883 = vmatprep.subr.mxu0 0.0
      %2884 = vmatpush1.msra.mxu0 0.0
      %2885 = vmatprep.subr.mxu0 0.0
      %2886 = vmatpush1.msra.mxu0 0.0
      %2887 = vmatprep.subr.mxu0 0.0
      %2888 = vmatpush1.msra.mxu0 0.0
      %2889 = vmatprep.subr.mxu0 0.0
      %2890 = vmatpush1.msra.mxu0 0.0
      %2891 = vmatprep.subr.mxu0 0.0
      %2892 = vmatpush1.msra.mxu0 0.0
      %2893 = vmatprep.subr.mxu0 0.0
      %2894 = vmatpush1.msra.mxu0 0.0
      %2895 = vmatprep.subr.mxu0 0.0
      %2896 = vmatpush1.msra.mxu0 0.0
      %2897 = vmatprep.subr.mxu0 0.0
      %2898 = vmatpush1.msra.mxu0 0.0
      %2899 = vmatprep.subr.mxu0 0.0
      %2900 = vmatpush1.msra.mxu0 0.0
      %2901 = vmatprep.subr.mxu0 0.0
      %2902 = vmatpush1.msra.mxu0 0.0
      %2903 = vmatprep.subr.mxu0 0.0
      %2904 = vmatpush1.msra.mxu0 0.0
      %2905 = vmatprep.subr.mxu0 0.0
      %2906 = vmatpush1.msra.mxu0 0.0
      %2907 = vmatprep.subr.mxu0 0.0
      %2908 = vmatpush1.msra.mxu0 0.0
      %2909 = vmatprep.subr.mxu0 0.0
      %2910 = vmatpush1.msra.mxu0 0.0
      %2911 = vmatprep.subr.mxu0 0.0
      %2912 = vmatpush1.msra.mxu0 0.0
      %2913 = vmatprep.subr.mxu0 0.0
      %2914 = vmatpush1.msra.mxu0 0.0
      %2915 = vmatprep.subr.mxu0 0.0
      %2916 = vmatpush1.msra.mxu0 0.0
      %2917 = vmatprep.subr.mxu0 0.0
      %2918 = vmatpush1.msra.mxu0 0.0
      %2919 = vmatprep.subr.mxu0 0.0
      %2920 = vmatpush1.msra.mxu0 0.0
      %2921 = vmatprep.subr.mxu0 0.0
      %2922 = vmatpush1.msra.mxu0 0.0
      %2923 = vmatprep.subr.mxu0 0.0
      %2924 = vmatpush1.msra.mxu0 0.0
      %2925 = vmatprep.subr.mxu0 0.0
      %2926 = vmatpush1.msra.mxu0 0.0
      %2927 = vmatprep.subr.mxu0 0.0
      %2928 = vmatpush1.msra.mxu0 0.0
      %2929 = vmatprep.subr.mxu0 0.0
      %2930 = vmatpush1.msra.mxu0 0.0
      %2931 = vmatprep.subr.mxu0 0.0
      %2932 = vmatpush1.msra.mxu0 0.0
      %2933 = vmatprep.subr.mxu0 0.0
      %2934 = vmatpush1.msra.mxu0 0.0
      %2935 = vmatprep.subr.mxu0 0.0
      %2936 = vmatpush1.msra.mxu0 0.0
      %2937 = vmatprep.subr.mxu0 0.0
      %2938 = vmatpush1.msra.mxu0 0.0
      %2939 = vmatprep.mubr.f32.mxu0 0.0
      %2940 = vmatmul.mubr.f32.gmra.mrb[0].mxu0 %v2870
      %v2941 = vpop.f32.mrb[0].mxu0
      %v2942 = vadd.f32 %v2861, %v2941
      %v2943 = vpop.f32.mrb[0].mxu0
      %v2944 = vadd.f32 %v2861, %v2943
      %2945 = vmatprep.mubr.f32.mxu0 0.0
      %2946 = vmatmul.mubr.f32.gmra.mrb[0].mxu0 %v2873
      %v2947 = vpop.f32.mrb[0].mxu0
      %v2948 = vadd.f32 %v2866, %v2947
      %v2949 = vpop.f32.mrb[0].mxu0
      %v2950 = vadd.f32 %v2866, %v2949
      %2951 = vdwg.mxu0
      %v2952 = vmax.f32 %v2942, 0.0
      %v2953 = vmax.f32 %v2944, 0.0
      %v2954 = vmax.f32 %v2948, 0.0
      %v2955 = vmax.f32 %v2950, 0.0
      %v2956 = vld [vmem:[%s8] sm:$0xff]
      %v2957 = vld [vmem:[%s9] sm:$0xff]
      %2959 = vset.pattern.permute.xlu0 0
      %2960 = vperm.xlu0 %2959, %v2957
      %v2961 = vpop.permute.xlu0 %2960
      %vm2963 = vcmask 130048
      %v2965 = vsel %vm2963, %v2956, 0
      %2967 = vmatprep.subr.mxu0 %v2953
      %2968 = vmatpush1.msra.mxu0 %v2952
      %2969 = vmatprep.subr.mxu0 %v2955
      %2970 = vmatpush1.msra.mxu0 %v2954
      %2971 = vmatprep.subr.mxu0 0.0
      %2972 = vmatpush1.msra.mxu0 0.0
      %2973 = vmatprep.subr.mxu0 0.0
      %2974 = vmatpush1.msra.mxu0 0.0
      %2975 = vmatprep.subr.mxu0 0.0
      %2976 = vmatpush1.msra.mxu0 0.0
      %2977 = vmatprep.subr.mxu0 0.0
      %2978 = vmatpush1.msra.mxu0 0.0
      %2979 = vmatprep.subr.mxu0 0.0
      %2980 = vmatpush1.msra.mxu0 0.0
      %2981 = vmatprep.subr.mxu0 0.0
      %2982 = vmatpush1.msra.mxu0 0.0
      %2983 = vmatprep.subr.mxu0 0.0
      %2984 = vmatpush1.msra.mxu0 0.0
      %2985 = vmatprep.subr.mxu0 0.0
      %2986 = vmatpush1.msra.mxu0 0.0
      %2987 = vmatprep.subr.mxu0 0.0
      %2988 = vmatpush1.msra.mxu0 0.0
      %2989 = vmatprep.subr.mxu0 0.0
      %2990 = vmatpush1.msra.mxu0 0.0
      %2991 = vmatprep.subr.mxu0 0.0
      %2992 = vmatpush1.msra.mxu0 0.0
      %2993 = vmatprep.subr.mxu0 0.0
      %2994 = vmatpush1.msra.mxu0 0.0
      %2995 = vmatprep.subr.mxu0 0.0
      %2996 = vmatpush1.msra.mxu0 0.0
      %2997 = vmatprep.subr.mxu0 0.0
      %2998 = vmatpush1.msra.mxu0 0.0
      %2999 = vmatprep.subr.mxu0 0.0
      %3000 = vmatpush1.msra.mxu0 0.0
      %3001 = vmatprep.subr.mxu0 0.0
      %3002 = vmatpush1.msra.mxu0 0.0
      %3003 = vmatprep.subr.mxu0 0.0
      %3004 = vmatpush1.msra.mxu0 0.0
      %3005 = vmatprep.subr.mxu0 0.0
      %3006 = vmatpush1.msra.mxu0 0.0
      %3007 = vmatprep.subr.mxu0 0.0
      %3008 = vmatpush1.msra.mxu0 0.0
      %3009 = vmatprep.subr.mxu0 0.0
      %3010 = vmatpush1.msra.mxu0 0.0
      %3011 = vmatprep.subr.mxu0 0.0
      %3012 = vmatpush1.msra.mxu0 0.0
      %3013 = vmatprep.subr.mxu0 0.0
      %3014 = vmatpush1.msra.mxu0 0.0
      %3015 = vmatprep.subr.mxu0 0.0
      %3016 = vmatpush1.msra.mxu0 0.0
      %3017 = vmatprep.subr.mxu0 0.0
      %3018 = vmatpush1.msra.mxu0 0.0
      %3019 = vmatprep.subr.mxu0 0.0
      %3020 = vmatpush1.msra.mxu0 0.0
      %3021 = vmatprep.subr.mxu0 0.0
      %3022 = vmatpush1.msra.mxu0 0.0
      %3023 = vmatprep.subr.mxu0 0.0
      %3024 = vmatpush1.msra.mxu0 0.0
      %3025 = vmatprep.subr.mxu0 0.0
      %3026 = vmatpush1.msra.mxu0 0.0
      %3027 = vmatprep.subr.mxu0 0.0
      %3028 = vmatpush1.msra.mxu0 0.0
      %3029 = vmatprep.subr.mxu0 0.0
      %3030 = vmatpush1.msra.mxu0 0.0
      %3031 = vmatprep.mubr.f32.mxu0 0.0
      %3032 = vmatmul.mubr.f32.gmra.mrb[0].mxu0 %v2965
      %v3033 = vpop.f32.mrb[0].mxu0
      %v3034 = vadd.f32 %v2961, %v3033
      %v3035 = vpop.f32.mrb[0].mxu0
      %v3036 = vadd.f32 %v2961, %v3035
      %3037 = vdwg.mxu0
      %3038 = vst [vmem:[%s359] sm:$0xff] %v3034
      %3039 = vst [vmem:[%s359 + $0x8] sm:$0xff] %v3036
      %p3040 = scmp.lt.s32.totalorder %s21, 1
      %s3041 = scalar_select %p3040, %s21, 1
      %s3042 = smul.addr %s3041, 2
      %s3043 = smul.addr %s3042, 8
      %s3044 = scalar_lea.vmem %s10, %s3043
      // Predicated region
      $region61: #{ihint_pallas.1} parent=59 // pred_check
        %p3045 = pneg %p254
      $region62: #{ihint_pallas.1} parent=59 // pred_check_branch
        %3047 = sbr.rel (%p3045) target = $region64
      $region63: #{ihint_pallas.1} parent=59 // pred_region
        _
      $region64: #{ihint_pallas.1} parent=59 // pred_fallthru
        _
    $region60: #{ihint_pallas.1} parent=5 // pred_fallthru
      _
    %p3048 = scmp.le.s32.totalorder 2, %s16
    // Predicated region
    $region65: #{ihint_pallas.1} parent=5 // pred_check
      %p3049 = pneg %p3048
    $region66: #{ihint_pallas.1} parent=5 // pred_check_branch
      %3051 = sbr.rel (%p3049) target = $region68
    $region67: #{ihint_pallas.1} parent=5 // pred_region
      %s3052 = ssub.s32 %s16, 2
      // Predicated region
      $region69: #{ihint_pallas.1} parent=67 // pred_check
        %p3053 = pneg %p260
      $region70: #{ihint_pallas.1} parent=67 // pred_check_branch
        %3055 = sbr.rel (%p3053) target = $region72
      $region71: #{ihint_pallas.1} parent=67 // pred_region
        %p3056 = scmp.lt.s32.totalorder %s22, 1
        %s3057 = scalar_select %p3056, %s22, 1
        %s3058 = smul.addr %s3057, 2
        %s3059 = smul.addr %s3058, 8
        %s3060 = scalar_lea.vmem %s10, %s3059
      $region72: #{ihint_pallas.1} parent=67 // pred_fallthru
        _
    $region68: #{ihint_pallas.1} parent=5 // pred_fallthru
      _
  $region6: #{ihint_pallas.1} parent=0 // loop_footer
    %s20 = sadd.s32 1, %s16
  $region7: #{ihint_pallas.1} parent=0 // loop_footer_branch
    %15 = sbr.rel target = $region3
  $region8: #{ihint_pallas.1} parent=0 // loop_exit
    _

</llo_original>
